<compile_context>
chip_gen: v5e
topology: v5e:2x2
jax: 0.10.0
libtpu: 0.0.40
codegen_flags: <defaults>
</compile_context>

<pallas_src>
import functools

import jax
import jax.numpy as jnp
import numpy as np
from jax.experimental import pallas as pl
from jax.experimental.pallas import tpu as pltpu


# ----------------------------------------------------------------------------
# Kernel: one grid step per transformer layer.  Patch-embed / token assembly
# runs under pl.when(layer == 0), the classification head under
# pl.when(layer == depth-1).  The token slab stays resident in VMEM scratch.
# ----------------------------------------------------------------------------
def _vit_layer_kernel(
    # constant (block index fixed across the grid)
    patches_ref, wpatch_ref, bpatch_ref, clspos_ref, posrest_ref,
    # streamed per layer (block index = layer)
    g1_ref, b1_ref, wqkv_ref, bqkv_ref, wproj_ref, bproj_ref,
    g2_ref, b2_ref, wfc1_ref, bfc1_ref, wfc2_ref, bfc2_ref,
    # constant (head)
    gf_ref, bf_ref, whead_ref, bhead_ref,
    # output
    out_ref,
    # scratch
    x_scr, o_scr,
    *, batch, num_patches, n_pad, num_heads, head_dim,
):
    f32 = jnp.float32
    bf16 = jnp.bfloat16
    P = num_patches
    N = P + 1
    HD = num_heads * head_dim          # model dim
    layer = pl.program_id(0)

    def layernorm(v, g, b):
        mu = jnp.mean(v, axis=-1, keepdims=True)
        var = jnp.mean((v - mu) ** 2, axis=-1, keepdims=True)
        return (v - mu) * jax.lax.rsqrt(var + 1e-6) * g + b

    # ---- step 0: patch embedding + [cls]/pos, written once into x scratch ----
    @pl.when(layer == 0)
    def _():
        emb = jnp.dot(patches_ref[...], wpatch_ref[...],
                      preferred_element_type=f32) + bpatch_ref[...]   # (B*P, D)
        zpad = jnp.zeros((n_pad - N, HD), f32)
        pieces = []
        for b in range(batch):
            pieces.append(clspos_ref[...])                       # cls + pos[0]
            pieces.append(emb[b * P:(b + 1) * P, :] + posrest_ref[...])
            if n_pad > N:
                pieces.append(zpad)                              # padded rows
        x_scr[...] = jnp.concatenate(pieces, axis=0)             # (B*N_pad, D)

    # key mask: padded key columns get -1e30 before softmax
    col = jax.lax.broadcasted_iota(jnp.int32, (1, n_pad), 1)
    key_mask = jnp.where(col < N, 0.0, -1e30).astype(f32)

    # ---- multi-head self-attention (fused QKV, fused output projection) ----
    x = x_scr[...]                                               # (B*N_pad, D) f32
    h = layernorm(x, g1_ref[0], b1_ref[0]).astype(bf16)
    # softmax scale is folded into the Q columns of wqkv/bqkv at init time
    qkv = jnp.dot(h, wqkv_ref[0],
                  preferred_element_type=f32) + bqkv_ref[0]      # (B*N_pad, 3*HD)
    for b in range(batch):
        r0 = b * n_pad                                           # sublane-aligned
        qkv_b = qkv[r0:r0 + n_pad, :]
        heads = []
        for hh in range(num_heads):
            c0 = hh * head_dim
            qh = qkv_b[:, c0:c0 + head_dim].astype(bf16)                     # (Np, hd)
            kh = qkv_b[:, HD + c0:HD + c0 + head_dim].astype(bf16)           # (Np, hd)
            vh = qkv_b[:, 2 * HD + c0:2 * HD + c0 + head_dim].astype(bf16)   # (Np, hd)
            s = jax.lax.dot_general(qh, kh, (((1,), (1,)), ((), ())),
                                    preferred_element_type=f32) + key_mask   # (Np, Np)
            s = s - jnp.max(s, axis=-1, keepdims=True)
            p = jnp.exp(s)
            inv = pl.reciprocal(jnp.sum(p, axis=-1, keepdims=True), approx=True)
            heads.append(jnp.dot(p.astype(bf16), vh,
                                 preferred_element_type=f32) * inv)          # (Np, hd)
        o_scr[pl.ds(r0, n_pad), :] = jnp.concatenate(heads, axis=-1)         # (Np, HD)
    # one projection matmul for the whole (B*N_pad, HD) slab
    x = x + jnp.dot(o_scr[...].astype(bf16), wproj_ref[0],
                    preferred_element_type=f32) + bproj_ref[0]

    # ---- MLP ----
    h2 = layernorm(x, g2_ref[0], b2_ref[0]).astype(bf16)
    m = jnp.dot(h2, wfc1_ref[0], preferred_element_type=f32) + bfc1_ref[0]
    # TODO(synk): timm ViT default is exact erf-GELU; tanh approximation used
    # here for robust Mosaic lowering.
    m = jax.nn.gelu(m, approximate=True)
    x = x + jnp.dot(m.astype(bf16), wfc2_ref[0],
                    preferred_element_type=f32) + bfc2_ref[0]
    x_scr[...] = x

    # ---- last step: final norm + cls-token head (lane-dense padded logits) ----
    @pl.when(layer == pl.num_programs(0) - 1)
    def _():
        cls_rows = jnp.concatenate(
            [x[b * n_pad:b * n_pad + 1, :] for b in range(batch)], axis=0)   # (B, D)
        cls_n = layernorm(cls_rows, gf_ref[...], bf_ref[...])
        out_ref[...] = (jnp.dot(cls_n.astype(bf16), whead_ref[...],
                                preferred_element_type=f32) + bhead_ref[...])


def vit_forward(x_nchw, params, *, patch, depth, num_heads, head_dim, num_classes):
    B = x_nchw.shape[0]
    patches = extract_patches(x_nchw, patch)                  # (B, P, C*p*p) f32
    _, P, in_dim = patches.shape
    N = P + 1
    n_pad = ((N + 7) // 8) * 8                                # 17 -> 24 (sublane aligned)
    D = num_heads * head_dim
    class_pad = params["whead"].shape[1]
    patches2d = patches.reshape(B * P, in_dim).astype(jnp.bfloat16)

    def full_spec(a):
        nd = a.ndim
        return pl.BlockSpec(a.shape, lambda l, _nd=nd: (0,) * _nd)

    def layer_spec(a):
        nd = a.ndim
        block = (1,) + a.shape[1:]
        return pl.BlockSpec(block, lambda l, _nd=nd: (l,) + (0,) * (_nd - 1))

    arg_specs = [
        (patches2d, full_spec(patches2d)),
        (params["patch_w"], full_spec(params["patch_w"])),
        (params["patch_b"], full_spec(params["patch_b"])),
        (params["cls_pos"], full_spec(params["cls_pos"])),
        (params["pos_rest"], full_spec(params["pos_rest"])),
        (params["g1"], layer_spec(params["g1"])),
        (params["b1"], layer_spec(params["b1"])),
        (params["wqkv"], layer_spec(params["wqkv"])),
        (params["bqkv"], layer_spec(params["bqkv"])),
        (params["wproj"], layer_spec(params["wproj"])),
        (params["bproj"], layer_spec(params["bproj"])),
        (params["g2"], layer_spec(params["g2"])),
        (params["b2"], layer_spec(params["b2"])),
        (params["wfc1"], layer_spec(params["wfc1"])),
        (params["bfc1"], layer_spec(params["bfc1"])),
        (params["wfc2"], layer_spec(params["wfc2"])),
        (params["bfc2"], layer_spec(params["bfc2"])),
        (params["gf"], full_spec(params["gf"])),
        (params["bf"], full_spec(params["bf"])),
        (params["whead"], full_spec(params["whead"])),
        (params["bhead"], full_spec(params["bhead"])),
    ]
    args = [a for a, _ in arg_specs]
    in_specs = [sp for _, sp in arg_specs]

    kernel = functools.partial(
        _vit_layer_kernel, batch=B, num_patches=P, n_pad=n_pad,
        num_heads=num_heads, head_dim=head_dim,
    )
    # Grid axis = transformer depth ("arbitrary": layers are sequential).
    # Per-layer weights are streamed (double-buffered) while the (B*N_pad, D)
    # token slab stays resident in VMEM scratch across grid steps.
    # TODO(synk): at realistic batch/sequence sizes add a leading "parallel"
    # row-block axis so both v7x TensorCores are used.
    logits_pad = pl.pallas_call(
        kernel,
        out_shape=jax.ShapeDtypeStruct((B, class_pad), jnp.float32),
        grid=(depth,),
        in_specs=in_specs,
        out_specs=pl.BlockSpec((B, class_pad), lambda l: (0, 0)),
        scratch_shapes=[
            pltpu.VMEM((B * n_pad, D), jnp.float32),   # resident token slab
            pltpu.VMEM((B * n_pad, D), jnp.float32),   # attention head outputs
        ],
        compiler_params=pltpu.CompilerParams(
            dimension_semantics=("arbitrary",)),
    )(*args)
    return logits_pad[:, :num_classes]


# ----------------------------------------------------------------------------
# Glue: patch extraction, parameter init, pure-JAX reference.
# ----------------------------------------------------------------------------
def extract_patches(x_nchw, patch):
    B, C, H, W = x_nchw.shape
    gh, gw = H // patch, W // patch
    x = x_nchw.reshape(B, C, gh, patch, gw, patch)
    x = x.transpose(0, 2, 4, 1, 3, 5)          # (B, gh, gw, C, p, p)
    return x.reshape(B, gh * gw, C * patch * patch)


def init_params(key, *, in_dim, depth, num_heads, head_dim, mlp_hidden,
                num_classes, num_patches, class_pad=128):
    D = num_heads * head_dim
    HD = D
    scale = head_dim ** -0.5
    s = 0.02
    f32, bf16 = jnp.float32, jnp.bfloat16
    ks = list(jax.random.split(key, 10))

    # Fused QKV weight; softmax scale folded into the Q columns.
    wq = s * jax.random.normal(ks[0], (depth, D, HD), f32)
    wk = s * jax.random.normal(ks[1], (depth, D, HD), f32)
    wv = s * jax.random.normal(ks[2], (depth, D, HD), f32)
    wqkv = jnp.concatenate([wq * scale, wk, wv], axis=-1).astype(bf16)  # (depth, D, 3*HD)
    bqkv = jnp.zeros((depth, 1, 3 * HD), f32)   # Q bias columns would also carry `scale`

    whead = jnp.zeros((D, class_pad), f32)
    whead = whead.at[:, :num_classes].set(
        s * jax.random.normal(ks[3], (D, num_classes), f32))

    return {
        "patch_w": (s * jax.random.normal(ks[4], (in_dim, D), f32)).astype(bf16),
        "patch_b": jnp.zeros((1, D), f32),
        "cls_pos": s * jax.random.normal(ks[5], (1, D), f32),    # cls token + pos[0]
        "pos_rest": s * jax.random.normal(ks[6], (num_patches, D), f32),
        "g1": jnp.ones((depth, 1, D), f32),
        "b1": jnp.zeros((depth, 1, D), f32),
        "wqkv": wqkv,
        "bqkv": bqkv,
        "wproj": (s * jax.random.normal(ks[7], (depth, HD, D), f32)).astype(bf16),
        "bproj": jnp.zeros((depth, 1, D), f32),
        "g2": jnp.ones((depth, 1, D), f32),
        "b2": jnp.zeros((depth, 1, D), f32),
        "wfc1": (s * jax.random.normal(ks[8], (depth, D, mlp_hidden), f32)).astype(bf16),
        "bfc1": jnp.zeros((depth, 1, mlp_hidden), f32),
        "wfc2": (s * jax.random.normal(ks[9], (depth, mlp_hidden, D), f32)).astype(bf16),
        "bfc2": jnp.zeros((depth, 1, D), f32),
        "gf": jnp.ones((1, D), f32),
        "bf": jnp.zeros((1, D), f32),
        "whead": whead.astype(bf16),
        "bhead": jnp.zeros((1, class_pad), f32),
    }


def vit_reference(x_nchw, params, *, patch, depth, num_heads, head_dim, num_classes):
    """Pure-JAX reference mirroring the kernel math (bf16 matmuls, f32 accum)."""
    f32, bf16 = jnp.float32, jnp.bfloat16
    B = x_nchw.shape[0]
    patches = extract_patches(x_nchw, patch)
    _, P, in_dim = patches.shape
    D = num_heads * head_dim
    HD = D
    N = P + 1
    emb = (jnp.dot(patches.reshape(B * P, in_dim).astype(bf16), params["patch_w"],
                   preferred_element_type=f32) + params["patch_b"]).reshape(B, P, D)
    emb = emb + params["pos_rest"][None]
    cls = jnp.broadcast_to(params["cls_pos"][None], (B, 1, D))
    x = jnp.concatenate([cls, emb], axis=1)                      # (B, N, D)

    def ln(v, g, b):
        mu = jnp.mean(v, axis=-1, keepdims=True)
        var = jnp.mean((v - mu) ** 2, axis=-1, keepdims=True)
        return (v - mu) * jax.lax.rsqrt(var + 1e-6) * g + b

    for l in range(depth):
        h = ln(x, params["g1"][l], params["b1"][l]).astype(bf16)
        qkv = (jnp.einsum("bnd,de->bne", h, params["wqkv"][l],
                          preferred_element_type=f32) + params["bqkv"][l])
        q = qkv[..., :HD].reshape(B, N, num_heads, head_dim).astype(bf16)
        k = qkv[..., HD:2 * HD].reshape(B, N, num_heads, head_dim).astype(bf16)
        v = qkv[..., 2 * HD:].reshape(B, N, num_heads, head_dim).astype(bf16)
        s = jnp.einsum("bqhd,bkhd->bhqk", q, k, preferred_element_type=f32)
        s = s - jnp.max(s, axis=-1, keepdims=True)
        p = jnp.exp(s)
        denom = jnp.sum(p, axis=-1, keepdims=True)               # (B, H, N, 1)
        o = (jnp.einsum("bhqk,bkhd->bqhd", p.astype(bf16), v,
                        preferred_element_type=f32)
             / jnp.transpose(denom, (0, 2, 1, 3)))               # (B, N, H, hd)
        o = o.reshape(B, N, HD)
        x = x + (jnp.einsum("bnd,de->bne", o.astype(bf16), params["wproj"][l],
                            preferred_element_type=f32) + params["bproj"][l])
        h2 = ln(x, params["g2"][l], params["b2"][l]).astype(bf16)
        m = (jnp.einsum("bnd,dh->bnh", h2, params["wfc1"][l],
                        preferred_element_type=f32) + params["bfc1"][l])
        m = jax.nn.gelu(m, approximate=True)
        x = x + (jnp.einsum("bnh,hd->bnd", m.astype(bf16), params["wfc2"][l],
                            preferred_element_type=f32) + params["bfc2"][l])

    cls_tok = x[:, 0, :]
    cls_n = ln(cls_tok, params["gf"], params["bf"])
    logits = (jnp.dot(cls_n.astype(bf16), params["whead"],
                      preferred_element_type=f32) + params["bhead"])
    return logits[:, :num_classes]


if __name__ == "__main__":
    # small ViT config consistent with the module's forward (num_classes=10)
    B, C, H, W = 2, 3, 16, 16
    PATCH = 4
    NUM_HEADS, HEAD_DIM = 2, 16
    D = NUM_HEADS * HEAD_DIM            # 32
    DEPTH = 2
    MLP_HIDDEN = 4 * D                  # 128
    NUM_CLASSES = 10
    NUM_PATCHES = (H // PATCH) * (W // PATCH)   # 16

    key = jax.random.PRNGKey(0)
    kx, kp = jax.random.split(key)
    x = jax.random.normal(kx, (B, C, H, W), jnp.float32)   # NCHW, like PyTorch
    params = init_params(
        kp, in_dim=C * PATCH * PATCH, depth=DEPTH, num_heads=NUM_HEADS,
        head_dim=HEAD_DIM, mlp_hidden=MLP_HIDDEN, num_classes=NUM_CLASSES,
        num_patches=NUM_PATCHES,
    )

    logits = vit_forward(
        x, params, patch=PATCH, depth=DEPTH, num_heads=NUM_HEADS,
        head_dim=HEAD_DIM, num_classes=NUM_CLASSES,
    )
    logits = jax.block_until_ready(logits)

    ref = vit_reference(
        x, params, patch=PATCH, depth=DEPTH, num_heads=NUM_HEADS,
        head_dim=HEAD_DIM, num_classes=NUM_CLASSES,
    )
    np.testing.assert_allclose(
        np.asarray(logits, dtype=np.float32), np.asarray(ref, dtype=np.float32),
        rtol=1e-2, atol=1e-2,
    )
    assert logits.shape == (B, NUM_CLASSES)
    print("KERNEL_OK")
</pallas_src>

<mosaic_0001>
module attributes {stable_mosaic.version = 11 : i64} {
  func.func @_vit_layer_kernel(%arg0: i32, %arg1: memref<32x48xbf16, #tpu.memory_space<vmem>>, %arg2: memref<48x32xbf16, #tpu.memory_space<vmem>>, %arg3: memref<1x32xf32, #tpu.memory_space<vmem>>, %arg4: memref<1x32xf32, #tpu.memory_space<vmem>>, %arg5: memref<16x32xf32, #tpu.memory_space<vmem>>, %arg6: memref<1x1x32xf32, #tpu.memory_space<vmem>>, %arg7: memref<1x1x32xf32, #tpu.memory_space<vmem>>, %arg8: memref<1x32x96xbf16, #tpu.memory_space<vmem>>, %arg9: memref<1x1x96xf32, #tpu.memory_space<vmem>>, %arg10: memref<1x32x32xbf16, #tpu.memory_space<vmem>>, %arg11: memref<1x1x32xf32, #tpu.memory_space<vmem>>, %arg12: memref<1x1x32xf32, #tpu.memory_space<vmem>>, %arg13: memref<1x1x32xf32, #tpu.memory_space<vmem>>, %arg14: memref<1x32x128xbf16, #tpu.memory_space<vmem>>, %arg15: memref<1x1x128xf32, #tpu.memory_space<vmem>>, %arg16: memref<1x128x32xbf16, #tpu.memory_space<vmem>>, %arg17: memref<1x1x32xf32, #tpu.memory_space<vmem>>, %arg18: memref<1x32xf32, #tpu.memory_space<vmem>>, %arg19: memref<1x32xf32, #tpu.memory_space<vmem>>, %arg20: memref<32x128xbf16, #tpu.memory_space<vmem>>, %arg21: memref<1x128xf32, #tpu.memory_space<vmem>>, %arg22: memref<2x128xf32, #tpu.memory_space<vmem>>, %arg23: memref<48x32xf32, #tpu.memory_space<vmem>>, %arg24: memref<48x32xf32, #tpu.memory_space<vmem>>) attributes {dimension_semantics = [#tpu.dimension_semantics<arbitrary>], iteration_bounds = array<i64: 2>, scalar_prefetch = 0 : i64, scratch_operands = 2 : i64, tpu.core_type = #tpu.core_type<tc>, window_params = [{pipeline_mode = #tpu.pipeline_mode<synchronous>, transform_indices = @transform_0, window_bounds = array<i64: 32, 48>}, {pipeline_mode = #tpu.pipeline_mode<synchronous>, transform_indices = @transform_1, window_bounds = array<i64: 48, 32>}, {pipeline_mode = #tpu.pipeline_mode<synchronous>, transform_indices = @transform_2, window_bounds = array<i64: 1, 32>}, {pipeline_mode = #tpu.pipeline_mode<synchronous>, transform_indices = @transform_3, window_bounds = array<i64: 1, 32>}, {pipeline_mode = #tpu.pipeline_mode<synchronous>, transform_indices = @transform_4, window_bounds = array<i64: 16, 32>}, {transform_indices = @transform_5, window_bounds = array<i64: 1, 1, 32>}, {transform_indices = @transform_6, window_bounds = array<i64: 1, 1, 32>}, {transform_indices = @transform_7, window_bounds = array<i64: 1, 32, 96>}, {transform_indices = @transform_8, window_bounds = array<i64: 1, 1, 96>}, {transform_indices = @transform_9, window_bounds = array<i64: 1, 32, 32>}, {transform_indices = @transform_10, window_bounds = array<i64: 1, 1, 32>}, {transform_indices = @transform_11, window_bounds = array<i64: 1, 1, 32>}, {transform_indices = @transform_12, window_bounds = array<i64: 1, 1, 32>}, {transform_indices = @transform_13, window_bounds = array<i64: 1, 32, 128>}, {transform_indices = @transform_14, window_bounds = array<i64: 1, 1, 128>}, {transform_indices = @transform_15, window_bounds = array<i64: 1, 128, 32>}, {transform_indices = @transform_16, window_bounds = array<i64: 1, 1, 32>}, {pipeline_mode = #tpu.pipeline_mode<synchronous>, transform_indices = @transform_17, window_bounds = array<i64: 1, 32>}, {pipeline_mode = #tpu.pipeline_mode<synchronous>, transform_indices = @transform_18, window_bounds = array<i64: 1, 32>}, {pipeline_mode = #tpu.pipeline_mode<synchronous>, transform_indices = @transform_19, window_bounds = array<i64: 32, 128>}, {pipeline_mode = #tpu.pipeline_mode<synchronous>, transform_indices = @transform_20, window_bounds = array<i64: 1, 128>}, {pipeline_mode = #tpu.pipeline_mode<synchronous>, transform_indices = @transform_21, window_bounds = array<i64: 2, 128>}]} {
    %c0_i32 = arith.constant 0 : i32
    %0 = arith.cmpi eq, %arg0, %c0_i32 : i32
    %1 = arith.extui %0 : i1 to i32
    %c0_i32_0 = arith.constant 0 : i32
    %2 = arith.cmpi ne, %1, %c0_i32_0 : i32
    scf.if %2 {
      %c0_81 = arith.constant 0 : index
      %c0_82 = arith.constant 0 : index
      %204 = vector.load %arg1[%c0_81, %c0_82] : memref<32x48xbf16, #tpu.memory_space<vmem>>, vector<32x48xbf16>
      %c0_83 = arith.constant 0 : index
      %c0_84 = arith.constant 0 : index
      %205 = vector.load %arg2[%c0_83, %c0_84] : memref<48x32xbf16, #tpu.memory_space<vmem>>, vector<48x32xbf16>
      %cst_85 = arith.constant dense<0.000000e+00> : vector<32x32xf32>
      %206 = tpu.matmul %204, %205, %cst_85 {dimension_numbers = #tpu.dot_dimension_numbers<[1], [0], [0], [1], [0, 0, 1, 1], [], []>} : vector<32x48xbf16>, vector<48x32xbf16>, vector<32x32xf32> -> vector<32x32xf32>
      %c0_86 = arith.constant 0 : index
      %c0_87 = arith.constant 0 : index
      %207 = vector.load %arg3[%c0_86, %c0_87] : memref<1x32xf32, #tpu.memory_space<vmem>>, vector<1x32xf32>
      %208 = vector.broadcast %207 : vector<1x32xf32> to vector<32x32xf32>
      %209 = arith.addf %206, %208 : vector<32x32xf32>
      %cst_88 = arith.constant 0.000000e+00 : f32
      %210 = vector.broadcast %cst_88 : f32 to vector<7x32xf32>
      %c0_89 = arith.constant 0 : index
      %c0_90 = arith.constant 0 : index
      %211 = vector.load %arg4[%c0_89, %c0_90] : memref<1x32xf32, #tpu.memory_space<vmem>>, vector<1x32xf32>
      %212 = vector.extract_strided_slice %209 {offsets = [0, 0], sizes = [16, 32], strides = [1, 1]} : vector<32x32xf32> to vector<16x32xf32>
      %c0_91 = arith.constant 0 : index
      %c0_92 = arith.constant 0 : index
      %213 = vector.load %arg5[%c0_91, %c0_92] : memref<16x32xf32, #tpu.memory_space<vmem>>, vector<16x32xf32>
      %214 = arith.addf %212, %213 : vector<16x32xf32>
      %c0_93 = arith.constant 0 : index
      %c0_94 = arith.constant 0 : index
      %215 = vector.load %arg4[%c0_93, %c0_94] : memref<1x32xf32, #tpu.memory_space<vmem>>, vector<1x32xf32>
      %216 = vector.extract_strided_slice %209 {offsets = [16, 0], sizes = [16, 32], strides = [1, 1]} : vector<32x32xf32> to vector<16x32xf32>
      %c0_95 = arith.constant 0 : index
      %c0_96 = arith.constant 0 : index
      %217 = vector.load %arg5[%c0_95, %c0_96] : memref<16x32xf32, #tpu.memory_space<vmem>>, vector<16x32xf32>
      %218 = arith.addf %216, %217 : vector<16x32xf32>
      %219 = tpu.concatenate %211, %214, %210, %215, %218, %210 in 0 : vector<1x32xf32>, vector<16x32xf32>, vector<7x32xf32>, vector<1x32xf32>, vector<16x32xf32>, vector<7x32xf32> -> vector<48x32xf32>
      %c0_97 = arith.constant 0 : index
      %c0_98 = arith.constant 0 : index
      %220 = vector.load %arg23[%c0_97, %c0_98] : memref<48x32xf32, #tpu.memory_space<vmem>>, vector<48x32xf32>
      tpu.vector_store %arg23[%c0_97, %c0_98], %219 {strides = array<i32>} : memref<48x32xf32, #tpu.memory_space<vmem>>, vector<48x32xf32>,
    } else {
    }
    %3 = tpu.iota {dimensions = array<i32: 1>} : vector<1x24xi32>
    %c17_i32 = arith.constant 17 : i32
    %4 = vector.broadcast %c17_i32 : i32 to vector<1x24xi32>
    %5 = arith.cmpi slt, %3, %4 : vector<1x24xi32>
    %cst = arith.constant 0.000000e+00 : f32
    %cst_1 = arith.constant -1.000000e+30 : f32
    %6 = vector.broadcast %cst : f32 to vector<1x24xf32>
    %7 = vector.broadcast %cst_1 : f32 to vector<1x24xf32>
    %8 = arith.select %5, %6, %7 : vector<1x24xi1>, vector<1x24xf32>
    %c0 = arith.constant 0 : index
    %c0_2 = arith.constant 0 : index
    %9 = vector.load %arg23[%c0, %c0_2] : memref<48x32xf32, #tpu.memory_space<vmem>>, vector<48x32xf32>
    %c0_3 = arith.constant 0 : index
    %c0_4 = arith.constant 0 : index
    %c0_5 = arith.constant 0 : index
    %10 = vector.load %arg6[%c0_3, %c0_4, %c0_5] : memref<1x1x32xf32, #tpu.memory_space<vmem>>, vector<1x1x32xf32>
    %11 = vector.shape_cast %10 : vector<1x1x32xf32> to vector<1x32xf32>
    %c0_6 = arith.constant 0 : index
    %c0_7 = arith.constant 0 : index
    %c0_8 = arith.constant 0 : index
    %12 = vector.load %arg7[%c0_6, %c0_7, %c0_8] : memref<1x1x32xf32, #tpu.memory_space<vmem>>, vector<1x1x32xf32>
    %13 = vector.shape_cast %12 : vector<1x1x32xf32> to vector<1x32xf32>
    %cst_9 = arith.constant dense<0.000000e+00> : vector<48xf32>
    %14 = vector.multi_reduction <add>, %9, %cst_9 [1] : vector<48x32xf32> to vector<48xf32>
    %15 = vector.shape_cast %14 : vector<48xf32> to vector<48x1xf32>
    %cst_10 = arith.constant 3.200000e+01 : f32
    %16 = vector.broadcast %cst_10 : f32 to vector<48x1xf32>
    %17 = arith.divf %15, %16 : vector<48x1xf32>
    %18 = vector.broadcast %17 : vector<48x1xf32> to vector<48x32xf32>
    %19 = arith.subf %9, %18 : vector<48x32xf32>
    %20 = arith.mulf %19, %19 : vector<48x32xf32>
    %cst_11 = arith.constant dense<0.000000e+00> : vector<48xf32>
    %21 = vector.multi_reduction <add>, %20, %cst_11 [1] : vector<48x32xf32> to vector<48xf32>
    %22 = vector.shape_cast %21 : vector<48xf32> to vector<48x1xf32>
    %cst_12 = arith.constant 3.200000e+01 : f32
    %23 = vector.broadcast %cst_12 : f32 to vector<48x1xf32>
    %24 = arith.divf %22, %23 : vector<48x1xf32>
    %25 = vector.broadcast %17 : vector<48x1xf32> to vector<48x32xf32>
    %26 = arith.subf %9, %25 : vector<48x32xf32>
    %cst_13 = arith.constant 9.99999997E-7 : f32
    %27 = vector.broadcast %cst_13 : f32 to vector<48x1xf32>
    %28 = arith.addf %24, %27 : vector<48x1xf32>
    %29 = math.rsqrt %28 : vector<48x1xf32>
    %30 = vector.broadcast %29 : vector<48x1xf32> to vector<48x32xf32>
    %31 = arith.mulf %26, %30 : vector<48x32xf32>
    %32 = vector.broadcast %11 : vector<1x32xf32> to vector<48x32xf32>
    %33 = arith.mulf %31, %32 : vector<48x32xf32>
    %34 = vector.broadcast %13 : vector<1x32xf32> to vector<48x32xf32>
    %35 = arith.addf %33, %34 : vector<48x32xf32>
    %36 = arith.truncf %35 : vector<48x32xf32> to vector<48x32xbf16>
    %c0_14 = arith.constant 0 : index
    %c0_15 = arith.constant 0 : index
    %c0_16 = arith.constant 0 : index
    %37 = vector.load %arg8[%c0_14, %c0_15, %c0_16] : memref<1x32x96xbf16, #tpu.memory_space<vmem>>, vector<1x32x96xbf16>
    %38 = vector.shape_cast %37 : vector<1x32x96xbf16> to vector<32x96xbf16>
    %cst_17 = arith.constant dense<0.000000e+00> : vector<48x96xf32>
    %39 = tpu.matmul %36, %38, %cst_17 {dimension_numbers = #tpu.dot_dimension_numbers<[1], [0], [0], [1], [0, 0, 1, 1], [], []>} : vector<48x32xbf16>, vector<32x96xbf16>, vector<48x96xf32> -> vector<48x96xf32>
    %c0_18 = arith.constant 0 : index
    %c0_19 = arith.constant 0 : index
    %c0_20 = arith.constant 0 : index
    %40 = vector.load %arg9[%c0_18, %c0_19, %c0_20] : memref<1x1x96xf32, #tpu.memory_space<vmem>>, vector<1x1x96xf32>
    %41 = vector.shape_cast %40 : vector<1x1x96xf32> to vector<1x96xf32>
    %42 = vector.broadcast %41 : vector<1x96xf32> to vector<48x96xf32>
    %43 = arith.addf %39, %42 : vector<48x96xf32>
    %44 = vector.extract_strided_slice %43 {offsets = [0, 0], sizes = [24, 96], strides = [1, 1]} : vector<48x96xf32> to vector<24x96xf32>
    %45 = vector.extract_strided_slice %44 {offsets = [0, 0], sizes = [24, 16], strides = [1, 1]} : vector<24x96xf32> to vector<24x16xf32>
    %46 = arith.truncf %45 : vector<24x16xf32> to vector<24x16xbf16>
    %47 = vector.extract_strided_slice %44 {offsets = [0, 32], sizes = [24, 16], strides = [1, 1]} : vector<24x96xf32> to vector<24x16xf32>
    %48 = arith.truncf %47 : vector<24x16xf32> to vector<24x16xbf16>
    %49 = vector.extract_strided_slice %44 {offsets = [0, 64], sizes = [24, 16], strides = [1, 1]} : vector<24x96xf32> to vector<24x16xf32>
    %50 = arith.truncf %49 : vector<24x16xf32> to vector<24x16xbf16>
    %cst_21 = arith.constant dense<0.000000e+00> : vector<24x24xf32>
    %51 = tpu.matmul %46, %48, %cst_21 {dimension_numbers = #tpu.dot_dimension_numbers<[1], [1], [0], [0], [0, 0, 1, 0], [], []>} : vector<24x16xbf16>, vector<24x16xbf16>, vector<24x24xf32> -> vector<24x24xf32>
    %52 = vector.broadcast %8 : vector<1x24xf32> to vector<24x24xf32>
    %53 = arith.addf %51, %52 : vector<24x24xf32>
    %cst_22 = arith.constant dense<0xFF800000> : vector<24xf32>
    %54 = vector.multi_reduction <maximumf>, %53, %cst_22 [1] : vector<24x24xf32> to vector<24xf32>
    %55 = vector.shape_cast %54 : vector<24xf32> to vector<24x1xf32>
    %56 = vector.broadcast %55 : vector<24x1xf32> to vector<24x24xf32>
    %57 = arith.subf %53, %56 : vector<24x24xf32>
    %58 = math.exp %57 : vector<24x24xf32>
    %cst_23 = arith.constant dense<0.000000e+00> : vector<24xf32>
    %59 = vector.multi_reduction <add>, %58, %cst_23 [1] : vector<24x24xf32> to vector<24xf32>
    %60 = vector.shape_cast %59 : vector<24xf32> to vector<24x1xf32>
    %61 = tpu.reciprocal %60 {approx = true} : vector<24x1xf32> -> vector<24x1xf32>
    %62 = arith.truncf %58 : vector<24x24xf32> to vector<24x24xbf16>
    %cst_24 = arith.constant dense<0.000000e+00> : vector<24x16xf32>
    %63 = tpu.matmul %62, %50, %cst_24 {dimension_numbers = #tpu.dot_dimension_numbers<[1], [0], [0], [1], [0, 0, 1, 1], [], []>} : vector<24x24xbf16>, vector<24x16xbf16>, vector<24x16xf32> -> vector<24x16xf32>
    %64 = vector.broadcast %61 : vector<24x1xf32> to vector<24x16xf32>
    %65 = arith.mulf %63, %64 : vector<24x16xf32>
    %66 = vector.extract_strided_slice %44 {offsets = [0, 16], sizes = [24, 16], strides = [1, 1]} : vector<24x96xf32> to vector<24x16xf32>
    %67 = arith.truncf %66 : vector<24x16xf32> to vector<24x16xbf16>
    %68 = vector.extract_strided_slice %44 {offsets = [0, 48], sizes = [24, 16], strides = [1, 1]} : vector<24x96xf32> to vector<24x16xf32>
    %69 = arith.truncf %68 : vector<24x16xf32> to vector<24x16xbf16>
    %70 = vector.extract_strided_slice %44 {offsets = [0, 80], sizes = [24, 16], strides = [1, 1]} : vector<24x96xf32> to vector<24x16xf32>
    %71 = arith.truncf %70 : vector<24x16xf32> to vector<24x16xbf16>
    %cst_25 = arith.constant dense<0.000000e+00> : vector<24x24xf32>
    %72 = tpu.matmul %67, %69, %cst_25 {dimension_numbers = #tpu.dot_dimension_numbers<[1], [1], [0], [0], [0, 0, 1, 0], [], []>} : vector<24x16xbf16>, vector<24x16xbf16>, vector<24x24xf32> -> vector<24x24xf32>
    %73 = vector.broadcast %8 : vector<1x24xf32> to vector<24x24xf32>
    %74 = arith.addf %72, %73 : vector<24x24xf32>
    %cst_26 = arith.constant dense<0xFF800000> : vector<24xf32>
    %75 = vector.multi_reduction <maximumf>, %74, %cst_26 [1] : vector<24x24xf32> to vector<24xf32>
    %76 = vector.shape_cast %75 : vector<24xf32> to vector<24x1xf32>
    %77 = vector.broadcast %76 : vector<24x1xf32> to vector<24x24xf32>
    %78 = arith.subf %74, %77 : vector<24x24xf32>
    %79 = math.exp %78 : vector<24x24xf32>
    %cst_27 = arith.constant dense<0.000000e+00> : vector<24xf32>
    %80 = vector.multi_reduction <add>, %79, %cst_27 [1] : vector<24x24xf32> to vector<24xf32>
    %81 = vector.shape_cast %80 : vector<24xf32> to vector<24x1xf32>
    %82 = tpu.reciprocal %81 {approx = true} : vector<24x1xf32> -> vector<24x1xf32>
    %83 = arith.truncf %79 : vector<24x24xf32> to vector<24x24xbf16>
    %cst_28 = arith.constant dense<0.000000e+00> : vector<24x16xf32>
    %84 = tpu.matmul %83, %71, %cst_28 {dimension_numbers = #tpu.dot_dimension_numbers<[1], [0], [0], [1], [0, 0, 1, 1], [], []>} : vector<24x24xbf16>, vector<24x16xbf16>, vector<24x16xf32> -> vector<24x16xf32>
    %85 = vector.broadcast %82 : vector<24x1xf32> to vector<24x16xf32>
    %86 = arith.mulf %84, %85 : vector<24x16xf32>
    %87 = tpu.concatenate %65, %86 in 1 : vector<24x16xf32>, vector<24x16xf32> -> vector<24x32xf32>
    %c0_29 = arith.constant 0 : index
    %c0_30 = arith.constant 0 : index
    %88 = vector.load %arg24[%c0_29, %c0_30] : memref<48x32xf32, #tpu.memory_space<vmem>>, vector<24x32xf32>
    tpu.vector_store %arg24[%c0_29, %c0_30], %87 {strides = array<i32>} : memref<48x32xf32, #tpu.memory_space<vmem>>, vector<24x32xf32>,
    %89 = vector.extract_strided_slice %43 {offsets = [24, 0], sizes = [24, 96], strides = [1, 1]} : vector<48x96xf32> to vector<24x96xf32>
    %90 = vector.extract_strided_slice %89 {offsets = [0, 0], sizes = [24, 16], strides = [1, 1]} : vector<24x96xf32> to vector<24x16xf32>
    %91 = arith.truncf %90 : vector<24x16xf32> to vector<24x16xbf16>
    %92 = vector.extract_strided_slice %89 {offsets = [0, 32], sizes = [24, 16], strides = [1, 1]} : vector<24x96xf32> to vector<24x16xf32>
    %93 = arith.truncf %92 : vector<24x16xf32> to vector<24x16xbf16>
    %94 = vector.extract_strided_slice %89 {offsets = [0, 64], sizes = [24, 16], strides = [1, 1]} : vector<24x96xf32> to vector<24x16xf32>
    %95 = arith.truncf %94 : vector<24x16xf32> to vector<24x16xbf16>
    %cst_31 = arith.constant dense<0.000000e+00> : vector<24x24xf32>
    %96 = tpu.matmul %91, %93, %cst_31 {dimension_numbers = #tpu.dot_dimension_numbers<[1], [1], [0], [0], [0, 0, 1, 0], [], []>} : vector<24x16xbf16>, vector<24x16xbf16>, vector<24x24xf32> -> vector<24x24xf32>
    %97 = vector.broadcast %8 : vector<1x24xf32> to vector<24x24xf32>
    %98 = arith.addf %96, %97 : vector<24x24xf32>
    %cst_32 = arith.constant dense<0xFF800000> : vector<24xf32>
    %99 = vector.multi_reduction <maximumf>, %98, %cst_32 [1] : vector<24x24xf32> to vector<24xf32>
    %100 = vector.shape_cast %99 : vector<24xf32> to vector<24x1xf32>
    %101 = vector.broadcast %100 : vector<24x1xf32> to vector<24x24xf32>
    %102 = arith.subf %98, %101 : vector<24x24xf32>
    %103 = math.exp %102 : vector<24x24xf32>
    %cst_33 = arith.constant dense<0.000000e+00> : vector<24xf32>
    %104 = vector.multi_reduction <add>, %103, %cst_33 [1] : vector<24x24xf32> to vector<24xf32>
    %105 = vector.shape_cast %104 : vector<24xf32> to vector<24x1xf32>
    %106 = tpu.reciprocal %105 {approx = true} : vector<24x1xf32> -> vector<24x1xf32>
    %107 = arith.truncf %103 : vector<24x24xf32> to vector<24x24xbf16>
    %cst_34 = arith.constant dense<0.000000e+00> : vector<24x16xf32>
    %108 = tpu.matmul %107, %95, %cst_34 {dimension_numbers = #tpu.dot_dimension_numbers<[1], [0], [0], [1], [0, 0, 1, 1], [], []>} : vector<24x24xbf16>, vector<24x16xbf16>, vector<24x16xf32> -> vector<24x16xf32>
    %109 = vector.broadcast %106 : vector<24x1xf32> to vector<24x16xf32>
    %110 = arith.mulf %108, %109 : vector<24x16xf32>
    %111 = vector.extract_strided_slice %89 {offsets = [0, 16], sizes = [24, 16], strides = [1, 1]} : vector<24x96xf32> to vector<24x16xf32>
    %112 = arith.truncf %111 : vector<24x16xf32> to vector<24x16xbf16>
    %113 = vector.extract_strided_slice %89 {offsets = [0, 48], sizes = [24, 16], strides = [1, 1]} : vector<24x96xf32> to vector<24x16xf32>
    %114 = arith.truncf %113 : vector<24x16xf32> to vector<24x16xbf16>
    %115 = vector.extract_strided_slice %89 {offsets = [0, 80], sizes = [24, 16], strides = [1, 1]} : vector<24x96xf32> to vector<24x16xf32>
    %116 = arith.truncf %115 : vector<24x16xf32> to vector<24x16xbf16>
    %cst_35 = arith.constant dense<0.000000e+00> : vector<24x24xf32>
    %117 = tpu.matmul %112, %114, %cst_35 {dimension_numbers = #tpu.dot_dimension_numbers<[1], [1], [0], [0], [0, 0, 1, 0], [], []>} : vector<24x16xbf16>, vector<24x16xbf16>, vector<24x24xf32> -> vector<24x24xf32>
    %118 = vector.broadcast %8 : vector<1x24xf32> to vector<24x24xf32>
    %119 = arith.addf %117, %118 : vector<24x24xf32>
    %cst_36 = arith.constant dense<0xFF800000> : vector<24xf32>
    %120 = vector.multi_reduction <maximumf>, %119, %cst_36 [1] : vector<24x24xf32> to vector<24xf32>
    %121 = vector.shape_cast %120 : vector<24xf32> to vector<24x1xf32>
    %122 = vector.broadcast %121 : vector<24x1xf32> to vector<24x24xf32>
    %123 = arith.subf %119, %122 : vector<24x24xf32>
    %124 = math.exp %123 : vector<24x24xf32>
    %cst_37 = arith.constant dense<0.000000e+00> : vector<24xf32>
    %125 = vector.multi_reduction <add>, %124, %cst_37 [1] : vector<24x24xf32> to vector<24xf32>
    %126 = vector.shape_cast %125 : vector<24xf32> to vector<24x1xf32>
    %127 = tpu.reciprocal %126 {approx = true} : vector<24x1xf32> -> vector<24x1xf32>
    %128 = arith.truncf %124 : vector<24x24xf32> to vector<24x24xbf16>
    %cst_38 = arith.constant dense<0.000000e+00> : vector<24x16xf32>
    %129 = tpu.matmul %128, %116, %cst_38 {dimension_numbers = #tpu.dot_dimension_numbers<[1], [0], [0], [1], [0, 0, 1, 1], [], []>} : vector<24x24xbf16>, vector<24x16xbf16>, vector<24x16xf32> -> vector<24x16xf32>
    %130 = vector.broadcast %127 : vector<24x1xf32> to vector<24x16xf32>
    %131 = arith.mulf %129, %130 : vector<24x16xf32>
    %132 = tpu.concatenate %110, %131 in 1 : vector<24x16xf32>, vector<24x16xf32> -> vector<24x32xf32>
    %c24 = arith.constant 24 : index
    %c0_39 = arith.constant 0 : index
    %133 = vector.load %arg24[%c24, %c0_39] : memref<48x32xf32, #tpu.memory_space<vmem>>, vector<24x32xf32>
    tpu.vector_store %arg24[%c24, %c0_39], %132 {strides = array<i32>} : memref<48x32xf32, #tpu.memory_space<vmem>>, vector<24x32xf32>,
    %c0_40 = arith.constant 0 : index
    %c0_41 = arith.constant 0 : index
    %134 = vector.load %arg24[%c0_40, %c0_41] : memref<48x32xf32, #tpu.memory_space<vmem>>, vector<48x32xf32>
    %135 = arith.truncf %134 : vector<48x32xf32> to vector<48x32xbf16>
    %c0_42 = arith.constant 0 : index
    %c0_43 = arith.constant 0 : index
    %c0_44 = arith.constant 0 : index
    %136 = vector.load %arg10[%c0_42, %c0_43, %c0_44] : memref<1x32x32xbf16, #tpu.memory_space<vmem>>, vector<1x32x32xbf16>
    %137 = vector.shape_cast %136 : vector<1x32x32xbf16> to vector<32x32xbf16>
    %cst_45 = arith.constant dense<0.000000e+00> : vector<48x32xf32>
    %138 = tpu.matmul %135, %137, %cst_45 {dimension_numbers = #tpu.dot_dimension_numbers<[1], [0], [0], [1], [0, 0, 1, 1], [], []>} : vector<48x32xbf16>, vector<32x32xbf16>, vector<48x32xf32> -> vector<48x32xf32>
    %139 = arith.addf %9, %138 : vector<48x32xf32>
    %c0_46 = arith.constant 0 : index
    %c0_47 = arith.constant 0 : index
    %c0_48 = arith.constant 0 : index
    %140 = vector.load %arg11[%c0_46, %c0_47, %c0_48] : memref<1x1x32xf32, #tpu.memory_space<vmem>>, vector<1x1x32xf32>
    %141 = vector.shape_cast %140 : vector<1x1x32xf32> to vector<1x32xf32>
    %142 = vector.broadcast %141 : vector<1x32xf32> to vector<48x32xf32>
    %143 = arith.addf %139, %142 : vector<48x32xf32>
    %c0_49 = arith.constant 0 : index
    %c0_50 = arith.constant 0 : index
    %c0_51 = arith.constant 0 : index
    %144 = vector.load %arg12[%c0_49, %c0_50, %c0_51] : memref<1x1x32xf32, #tpu.memory_space<vmem>>, vector<1x1x32xf32>
    %145 = vector.shape_cast %144 : vector<1x1x32xf32> to vector<1x32xf32>
    %c0_52 = arith.constant 0 : index
    %c0_53 = arith.constant 0 : index
    %c0_54 = arith.constant 0 : index
    %146 = vector.load %arg13[%c0_52, %c0_53, %c0_54] : memref<1x1x32xf32, #tpu.memory_space<vmem>>, vector<1x1x32xf32>
    %147 = vector.shape_cast %146 : vector<1x1x32xf32> to vector<1x32xf32>
    %cst_55 = arith.constant dense<0.000000e+00> : vector<48xf32>
    %148 = vector.multi_reduction <add>, %143, %cst_55 [1] : vector<48x32xf32> to vector<48xf32>
    %149 = vector.shape_cast %148 : vector<48xf32> to vector<48x1xf32>
    %cst_56 = arith.constant 3.200000e+01 : f32
    %150 = vector.broadcast %cst_56 : f32 to vector<48x1xf32>
    %151 = arith.divf %149, %150 : vector<48x1xf32>
    %152 = vector.broadcast %151 : vector<48x1xf32> to vector<48x32xf32>
    %153 = arith.subf %143, %152 : vector<48x32xf32>
    %154 = arith.mulf %153, %153 : vector<48x32xf32>
    %cst_57 = arith.constant dense<0.000000e+00> : vector<48xf32>
    %155 = vector.multi_reduction <add>, %154, %cst_57 [1] : vector<48x32xf32> to vector<48xf32>
    %156 = vector.shape_cast %155 : vector<48xf32> to vector<48x1xf32>
    %cst_58 = arith.constant 3.200000e+01 : f32
    %157 = vector.broadcast %cst_58 : f32 to vector<48x1xf32>
    %158 = arith.divf %156, %157 : vector<48x1xf32>
    %159 = vector.broadcast %151 : vector<48x1xf32> to vector<48x32xf32>
    %160 = arith.subf %143, %159 : vector<48x32xf32>
    %cst_59 = arith.constant 9.99999997E-7 : f32
    %161 = vector.broadcast %cst_59 : f32 to vector<48x1xf32>
    %162 = arith.addf %158, %161 : vector<48x1xf32>
    %163 = math.rsqrt %162 : vector<48x1xf32>
    %164 = vector.broadcast %163 : vector<48x1xf32> to vector<48x32xf32>
    %165 = arith.mulf %160, %164 : vector<48x32xf32>
    %166 = vector.broadcast %145 : vector<1x32xf32> to vector<48x32xf32>
    %167 = arith.mulf %165, %166 : vector<48x32xf32>
    %168 = vector.broadcast %147 : vector<1x32xf32> to vector<48x32xf32>
    %169 = arith.addf %167, %168 : vector<48x32xf32>
    %170 = arith.truncf %169 : vector<48x32xf32> to vector<48x32xbf16>
    %c0_60 = arith.constant 0 : index
    %c0_61 = arith.constant 0 : index
    %c0_62 = arith.constant 0 : index
    %171 = vector.load %arg14[%c0_60, %c0_61, %c0_62] : memref<1x32x128xbf16, #tpu.memory_space<vmem>>, vector<1x32x128xbf16>
    %172 = vector.shape_cast %171 : vector<1x32x128xbf16> to vector<32x128xbf16>
    %cst_63 = arith.constant dense<0.000000e+00> : vector<48x128xf32>
    %173 = tpu.matmul %170, %172, %cst_63 {dimension_numbers = #tpu.dot_dimension_numbers<[1], [0], [0], [1], [0, 0, 1, 1], [], []>} : vector<48x32xbf16>, vector<32x128xbf16>, vector<48x128xf32> -> vector<48x128xf32>
    %c0_64 = arith.constant 0 : index
    %c0_65 = arith.constant 0 : index
    %c0_66 = arith.constant 0 : index
    %174 = vector.load %arg15[%c0_64, %c0_65, %c0_66] : memref<1x1x128xf32, #tpu.memory_space<vmem>>, vector<1x1x128xf32>
    %175 = vector.shape_cast %174 : vector<1x1x128xf32> to vector<1x128xf32>
    %176 = vector.broadcast %175 : vector<1x128xf32> to vector<48x128xf32>
    %177 = arith.addf %173, %176 : vector<48x128xf32>
    %178 = arith.mulf %177, %177 : vector<48x128xf32>
    %179 = arith.mulf %177, %178 : vector<48x128xf32>
    %cst_67 = arith.constant 4.471500e-02 : f32
    %180 = vector.broadcast %cst_67 : f32 to vector<48x128xf32>
    %181 = arith.mulf %180, %179 : vector<48x128xf32>
    %182 = arith.addf %177, %181 : vector<48x128xf32>
    %cst_68 = arith.constant 0.797884583 : f32
    %183 = vector.broadcast %cst_68 : f32 to vector<48x128xf32>
    %184 = arith.mulf %183, %182 : vector<48x128xf32>
    %185 = math.tanh %184 : vector<48x128xf32>
    %cst_69 = arith.constant 1.000000e+00 : f32
    %186 = vector.broadcast %cst_69 : f32 to vector<48x128xf32>
    %187 = arith.addf %186, %185 : vector<48x128xf32>
    %cst_70 = arith.constant 5.000000e-01 : f32
    %188 = vector.broadcast %cst_70 : f32 to vector<48x128xf32>
    %189 = arith.mulf %188, %187 : vector<48x128xf32>
    %190 = arith.mulf %177, %189 : vector<48x128xf32>
    %191 = arith.truncf %190 : vector<48x128xf32> to vector<48x128xbf16>
    %c0_71 = arith.constant 0 : index
    %c0_72 = arith.constant 0 : index
    %c0_73 = arith.constant 0 : index
    %192 = vector.load %arg16[%c0_71, %c0_72, %c0_73] : memref<1x128x32xbf16, #tpu.memory_space<vmem>>, vector<1x128x32xbf16>
    %193 = vector.shape_cast %192 : vector<1x128x32xbf16> to vector<128x32xbf16>
    %cst_74 = arith.constant dense<0.000000e+00> : vector<48x32xf32>
    %194 = tpu.matmul %191, %193, %cst_74 {dimension_numbers = #tpu.dot_dimension_numbers<[1], [0], [0], [1], [0, 0, 1, 1], [], []>} : vector<48x128xbf16>, vector<128x32xbf16>, vector<48x32xf32> -> vector<48x32xf32>
    %195 = arith.addf %143, %194 : vector<48x32xf32>
    %c0_75 = arith.constant 0 : index
    %c0_76 = arith.constant 0 : index
    %c0_77 = arith.constant 0 : index
    %196 = vector.load %arg17[%c0_75, %c0_76, %c0_77] : memref<1x1x32xf32, #tpu.memory_space<vmem>>, vector<1x1x32xf32>
    %197 = vector.shape_cast %196 : vector<1x1x32xf32> to vector<1x32xf32>
    %198 = vector.broadcast %197 : vector<1x32xf32> to vector<48x32xf32>
    %199 = arith.addf %195, %198 : vector<48x32xf32>
    %c0_78 = arith.constant 0 : index
    %c0_79 = arith.constant 0 : index
    %200 = vector.load %arg23[%c0_78, %c0_79] : memref<48x32xf32, #tpu.memory_space<vmem>>, vector<48x32xf32>
    tpu.vector_store %arg23[%c0_78, %c0_79], %199 {strides = array<i32>} : memref<48x32xf32, #tpu.memory_space<vmem>>, vector<48x32xf32>,
    %c1_i32 = arith.constant 1 : i32
    %201 = arith.cmpi eq, %arg0, %c1_i32 : i32
    %202 = arith.extui %201 : i1 to i32
    %c0_i32_80 = arith.constant 0 : i32
    %203 = arith.cmpi ne, %202, %c0_i32_80 : i32
    scf.if %203 {
      %204 = vector.extract_strided_slice %199 {offsets = [0, 0], sizes = [1, 32], strides = [1, 1]} : vector<48x32xf32> to vector<1x32xf32>
      %205 = vector.extract_strided_slice %199 {offsets = [24, 0], sizes = [1, 32], strides = [1, 1]} : vector<48x32xf32> to vector<1x32xf32>
      %206 = tpu.concatenate %204, %205 in 0 : vector<1x32xf32>, vector<1x32xf32> -> vector<2x32xf32>
      %c0_81 = arith.constant 0 : index
      %c0_82 = arith.constant 0 : index
      %207 = vector.load %arg18[%c0_81, %c0_82] : memref<1x32xf32, #tpu.memory_space<vmem>>, vector<1x32xf32>
      %c0_83 = arith.constant 0 : index
      %c0_84 = arith.constant 0 : index
      %208 = vector.load %arg19[%c0_83, %c0_84] : memref<1x32xf32, #tpu.memory_space<vmem>>, vector<1x32xf32>
      %cst_85 = arith.constant dense<0.000000e+00> : vector<2xf32>
      %209 = vector.multi_reduction <add>, %206, %cst_85 [1] : vector<2x32xf32> to vector<2xf32>
      %210 = vector.shape_cast %209 : vector<2xf32> to vector<2x1xf32>
      %cst_86 = arith.constant 3.200000e+01 : f32
      %211 = vector.broadcast %cst_86 : f32 to vector<2x1xf32>
      %212 = arith.divf %210, %211 : vector<2x1xf32>
      %213 = vector.broadcast %212 : vector<2x1xf32> to vector<2x32xf32>
      %214 = arith.subf %206, %213 : vector<2x32xf32>
      %215 = arith.mulf %214, %214 : vector<2x32xf32>
      %cst_87 = arith.constant dense<0.000000e+00> : vector<2xf32>
      %216 = vector.multi_reduction <add>, %215, %cst_87 [1] : vector<2x32xf32> to vector<2xf32>
      %217 = vector.shape_cast %216 : vector<2xf32> to vector<2x1xf32>
      %cst_88 = arith.constant 3.200000e+01 : f32
      %218 = vector.broadcast %cst_88 : f32 to vector<2x1xf32>
      %219 = arith.divf %217, %218 : vector<2x1xf32>
      %220 = vector.broadcast %212 : vector<2x1xf32> to vector<2x32xf32>
      %221 = arith.subf %206, %220 : vector<2x32xf32>
      %cst_89 = arith.constant 9.99999997E-7 : f32
      %222 = vector.broadcast %cst_89 : f32 to vector<2x1xf32>
      %223 = arith.addf %219, %222 : vector<2x1xf32>
      %224 = math.rsqrt %223 : vector<2x1xf32>
      %225 = vector.broadcast %224 : vector<2x1xf32> to vector<2x32xf32>
      %226 = arith.mulf %221, %225 : vector<2x32xf32>
      %227 = vector.broadcast %207 : vector<1x32xf32> to vector<2x32xf32>
      %228 = arith.mulf %226, %227 : vector<2x32xf32>
      %229 = vector.broadcast %208 : vector<1x32xf32> to vector<2x32xf32>
      %230 = arith.addf %228, %229 : vector<2x32xf32>
      %231 = arith.truncf %230 : vector<2x32xf32> to vector<2x32xbf16>
      %c0_90 = arith.constant 0 : index
      %c0_91 = arith.constant 0 : index
      %232 = vector.load %arg20[%c0_90, %c0_91] : memref<32x128xbf16, #tpu.memory_space<vmem>>, vector<32x128xbf16>
      %cst_92 = arith.constant dense<0.000000e+00> : vector<2x128xf32>
      %233 = tpu.matmul %231, %232, %cst_92 {dimension_numbers = #tpu.dot_dimension_numbers<[1], [0], [0], [1], [0, 0, 1, 1], [], []>} : vector<2x32xbf16>, vector<32x128xbf16>, vector<2x128xf32> -> vector<2x128xf32>
      %c0_93 = arith.constant 0 : index
      %c0_94 = arith.constant 0 : index
      %234 = vector.load %arg21[%c0_93, %c0_94] : memref<1x128xf32, #tpu.memory_space<vmem>>, vector<1x128xf32>
      %235 = vector.broadcast %234 : vector<1x128xf32> to vector<2x128xf32>
      %236 = arith.addf %233, %235 : vector<2x128xf32>
      %c0_95 = arith.constant 0 : index
      %c0_96 = arith.constant 0 : index
      %237 = vector.load %arg22[%c0_95, %c0_96] : memref<2x128xf32, #tpu.memory_space<vmem>>, vector<2x128xf32>
      tpu.vector_store %arg22[%c0_95, %c0_96], %236 {strides = array<i32>} : memref<2x128xf32, #tpu.memory_space<vmem>>, vector<2x128xf32>,
    } else {
    }
    return
  }
  func.func @transform_0(%arg0: i32) -> (i32, i32) {
    %c0_i32 = arith.constant 0 : i32
    %c0_i32_0 = arith.constant 0 : i32
    %c0_i32_1 = arith.constant 0 : i32
    return %c0_i32, %c0_i32_0 : i32, i32
  }
  func.func @transform_1(%arg0: i32) -> (i32, i32) {
    %c0_i32 = arith.constant 0 : i32
    %c0_i32_0 = arith.constant 0 : i32
    %c0_i32_1 = arith.constant 0 : i32
    return %c0_i32, %c0_i32_0 : i32, i32
  }
  func.func @transform_2(%arg0: i32) -> (i32, i32) {
    %c0_i32 = arith.constant 0 : i32
    %c0_i32_0 = arith.constant 0 : i32
    %c0_i32_1 = arith.constant 0 : i32
    return %c0_i32, %c0_i32_0 : i32, i32
  }
  func.func @transform_3(%arg0: i32) -> (i32, i32) {
    %c0_i32 = arith.constant 0 : i32
    %c0_i32_0 = arith.constant 0 : i32
    %c0_i32_1 = arith.constant 0 : i32
    return %c0_i32, %c0_i32_0 : i32, i32
  }
  func.func @transform_4(%arg0: i32) -> (i32, i32) {
    %c0_i32 = arith.constant 0 : i32
    %c0_i32_0 = arith.constant 0 : i32
    %c0_i32_1 = arith.constant 0 : i32
    return %c0_i32, %c0_i32_0 : i32, i32
  }
  func.func @transform_5(%arg0: i32) -> (i32, i32, i32) {
    %c0_i32 = arith.constant 0 : i32
    %c0_i32_0 = arith.constant 0 : i32
    %c0_i32_1 = arith.constant 0 : i32
    return %arg0, %c0_i32, %c0_i32_0 : i32, i32, i32
  }
  func.func @transform_6(%arg0: i32) -> (i32, i32, i32) {
    %c0_i32 = arith.constant 0 : i32
    %c0_i32_0 = arith.constant 0 : i32
    %c0_i32_1 = arith.constant 0 : i32
    return %arg0, %c0_i32, %c0_i32_0 : i32, i32, i32
  }
  func.func @transform_7(%arg0: i32) -> (i32, i32, i32) {
    %c0_i32 = arith.constant 0 : i32
    %c0_i32_0 = arith.constant 0 : i32
    %c0_i32_1 = arith.constant 0 : i32
    return %arg0, %c0_i32, %c0_i32_0 : i32, i32, i32
  }
  func.func @transform_8(%arg0: i32) -> (i32, i32, i32) {
    %c0_i32 = arith.constant 0 : i32
    %c0_i32_0 = arith.constant 0 : i32
    %c0_i32_1 = arith.constant 0 : i32
    return %arg0, %c0_i32, %c0_i32_0 : i32, i32, i32
  }
  func.func @transform_9(%arg0: i32) -> (i32, i32, i32) {
    %c0_i32 = arith.constant 0 : i32
    %c0_i32_0 = arith.constant 0 : i32
    %c0_i32_1 = arith.constant 0 : i32
    return %arg0, %c0_i32, %c0_i32_0 : i32, i32, i32
  }
  func.func @transform_10(%arg0: i32) -> (i32, i32, i32) {
    %c0_i32 = arith.constant 0 : i32
    %c0_i32_0 = arith.constant 0 : i32
    %c0_i32_1 = arith.constant 0 : i32
    return %arg0, %c0_i32, %c0_i32_0 : i32, i32, i32
  }
  func.func @transform_11(%arg0: i32) -> (i32, i32, i32) {
    %c0_i32 = arith.constant 0 : i32
    %c0_i32_0 = arith.constant 0 : i32
    %c0_i32_1 = arith.constant 0 : i32
    return %arg0, %c0_i32, %c0_i32_0 : i32, i32, i32
  }
  func.func @transform_12(%arg0: i32) -> (i32, i32, i32) {
    %c0_i32 = arith.constant 0 : i32
    %c0_i32_0 = arith.constant 0 : i32
    %c0_i32_1 = arith.constant 0 : i32
    return %arg0, %c0_i32, %c0_i32_0 : i32, i32, i32
  }
  func.func @transform_13(%arg0: i32) -> (i32, i32, i32) {
    %c0_i32 = arith.constant 0 : i32
    %c0_i32_0 = arith.constant 0 : i32
    %c0_i32_1 = arith.constant 0 : i32
    return %arg0, %c0_i32, %c0_i32_0 : i32, i32, i32
  }
  func.func @transform_14(%arg0: i32) -> (i32, i32, i32) {
    %c0_i32 = arith.constant 0 : i32
    %c0_i32_0 = arith.constant 0 : i32
    %c0_i32_1 = arith.constant 0 : i32
    return %arg0, %c0_i32, %c0_i32_0 : i32, i32, i32
  }
  func.func @transform_15(%arg0: i32) -> (i32, i32, i32) {
    %c0_i32 = arith.constant 0 : i32
    %c0_i32_0 = arith.constant 0 : i32
    %c0_i32_1 = arith.constant 0 : i32
    return %arg0, %c0_i32, %c0_i32_0 : i32, i32, i32
  }
  func.func @transform_16(%arg0: i32) -> (i32, i32, i32) {
    %c0_i32 = arith.constant 0 : i32
    %c0_i32_0 = arith.constant 0 : i32
    %c0_i32_1 = arith.constant 0 : i32
    return %arg0, %c0_i32, %c0_i32_0 : i32, i32, i32
  }
  func.func @transform_17(%arg0: i32) -> (i32, i32) {
    %c0_i32 = arith.constant 0 : i32
    %c0_i32_0 = arith.constant 0 : i32
    %c0_i32_1 = arith.constant 0 : i32
    return %c0_i32, %c0_i32_0 : i32, i32
  }
  func.func @transform_18(%arg0: i32) -> (i32, i32) {
    %c0_i32 = arith.constant 0 : i32
    %c0_i32_0 = arith.constant 0 : i32
    %c0_i32_1 = arith.constant 0 : i32
    return %c0_i32, %c0_i32_0 : i32, i32
  }
  func.func @transform_19(%arg0: i32) -> (i32, i32) {
    %c0_i32 = arith.constant 0 : i32
    %c0_i32_0 = arith.constant 0 : i32
    %c0_i32_1 = arith.constant 0 : i32
    return %c0_i32, %c0_i32_0 : i32, i32
  }
  func.func @transform_20(%arg0: i32) -> (i32, i32) {
    %c0_i32 = arith.constant 0 : i32
    %c0_i32_0 = arith.constant 0 : i32
    %c0_i32_1 = arith.constant 0 : i32
    return %c0_i32, %c0_i32_0 : i32, i32
  }
  func.func @transform_21(%arg0: i32) -> (i32, i32) {
    %c0_i32 = arith.constant 0 : i32
    %c0_i32_0 = arith.constant 0 : i32
    %c0_i32_1 = arith.constant 0 : i32
    return %c0_i32, %c0_i32_0 : i32, i32
  }
}

</mosaic_0001>

<llo_original>
// kernel: tpu_custom_call.1
$region0: #{tpu_custom_call.1}
  #allocation0 [shape = 'u32[]', space=smem, size = 0x4, offset = 0x4, fixed_abs, tag = 'smem constant byte address 0x4 - core index']
  #allocation1 [shape = 'u32[72,128]{1,0:T(1,128)}', space=vmem, size = 0x9000, scoped, tag = 'internal scratch']
  #allocation2 [shape = 'f32[48,32]{1,0:T(8,128)}', space=vmem, size = 0x6000, scoped, tag = 'scratch operand']
  #allocation3 [shape = 'f32[48,32]{1,0:T(8,128)}', space=vmem, size = 0x6000, scoped, tag = 'scratch operand']
  %s0 = inlined_call_operand.vmem [shape: bf16[32,48], index: 0, kind: input, shape index: {}]
  %s1 = inlined_call_operand.vmem [shape: bf16[48,32], index: 1, kind: input, shape index: {}]
  %s2 = inlined_call_operand.vmem [shape: f32[1,32], index: 2, kind: input, shape index: {}]
  %s3 = inlined_call_operand.vmem [shape: f32[1,32], index: 3, kind: input, shape index: {}]
  %s4 = inlined_call_operand.vmem [shape: f32[16,32], index: 4, kind: input, shape index: {}]
  %s5 = inlined_call_operand.vmem [shape: f32[2,1,32], index: 5, kind: input, shape index: {}]
  %s6 = inlined_call_operand.vmem [shape: f32[2,1,32], index: 6, kind: input, shape index: {}]
  %s7 = inlined_call_operand.vmem [shape: bf16[2,32,96], index: 7, kind: input, shape index: {}]
  %s8 = inlined_call_operand.vmem [shape: f32[2,1,96], index: 8, kind: input, shape index: {}]
  %s9 = inlined_call_operand.vmem [shape: bf16[2,32,32], index: 9, kind: input, shape index: {}]
  %s10 = inlined_call_operand.vmem [shape: f32[2,1,32], index: 10, kind: input, shape index: {}]
  %s11 = inlined_call_operand.vmem [shape: f32[2,1,32], index: 11, kind: input, shape index: {}]
  %s12 = inlined_call_operand.vmem [shape: f32[2,1,32], index: 12, kind: input, shape index: {}]
  %s13 = inlined_call_operand.vmem [shape: bf16[2,32,128], index: 13, kind: input, shape index: {}]
  %s14 = inlined_call_operand.vmem [shape: f32[2,1,128], index: 14, kind: input, shape index: {}]
  %s15 = inlined_call_operand.vmem [shape: bf16[2,128,32], index: 15, kind: input, shape index: {}]
  %s16 = inlined_call_operand.vmem [shape: f32[2,1,32], index: 16, kind: input, shape index: {}]
  %s17 = inlined_call_operand.vmem [shape: f32[1,32], index: 17, kind: input, shape index: {}]
  %s18 = inlined_call_operand.vmem [shape: f32[1,32], index: 18, kind: input, shape index: {}]
  %s19 = inlined_call_operand.vmem [shape: bf16[32,128], index: 19, kind: input, shape index: {}]
  %s20 = inlined_call_operand.vmem [shape: f32[1,128], index: 20, kind: input, shape index: {}]
  %s21 = inlined_call_operand.hbm [shape: f32[2,128], index: 21, kind: output, shape index: {}]
  %s22 = sld [smem:[#allocation0]]
  $region125: #{tpu_custom_call.1} parent=0
    _
  %s24 = ssub.s32 1, %s22
  %s25 = scalar_select 0, %s24, %s22
  $region1: #{tpu_custom_call.1} parent=0
    #allocation4 [shape = 'u8[1024]{0}', space=vmem, size = 0x400, scoped, tag = 'output window, operand 0, single buffered']
    #allocation5 [shape = 's32[2]{0}', space=sflag, size = 0x8, scoped, tag = 'scoped memory for tpu_custom_call.1']
    %26 = vsyncpa [#allocation5], 0
    loop: start=0, step=1, limit=4
    $region2: #{tpu_custom_call.1} parent=1 // loop_pre_header
      _
    $region3: #{tpu_custom_call.1} parent=1 // loop_header
      %s28 = sphi 0, %s32
      %p29 = scmp.ge.s32.totalorder %s28, 4
      %s36 = sphi 0, %s36
      %s38 = sphi 0, %s36
      %s39 = sphi 0, %s38
      %s53 = sphi 0, %s39
      %s57 = sphi 0, %s57
      %s59 = sphi 0, %s57
      %s60 = sphi 0, %s59
      %s74 = sphi 0, %s60
      %s78 = sphi 0, %s78
      %s80 = sphi 0, %s78
      %s81 = sphi 0, %s80
      %s95 = sphi 0, %s81
      %s99 = sphi 0, %s99
      %s101 = sphi 0, %s99
      %s102 = sphi 0, %s101
      %s116 = sphi 0, %s102
      %s120 = sphi 0, %s120
      %s122 = sphi 0, %s120
      %s123 = sphi 0, %s122
      %s137 = sphi 0, %s123
      %s143 = sphi 0, %s145
      %s146 = sphi 0, %s143
      %s147 = sphi 0, %s146
      %s163 = sphi 0, %s147
      %s169 = sphi 0, %s171
      %s172 = sphi 0, %s169
      %s173 = sphi 0, %s172
      %s189 = sphi 0, %s173
      %s195 = sphi 0, %s197
      %s198 = sphi 0, %s195
      %s199 = sphi 0, %s198
      %s215 = sphi 0, %s199
      %s221 = sphi 0, %s223
      %s224 = sphi 0, %s221
      %s225 = sphi 0, %s224
      %s241 = sphi 0, %s225
      %s247 = sphi 0, %s249
      %s250 = sphi 0, %s247
      %s251 = sphi 0, %s250
      %s267 = sphi 0, %s251
      %s273 = sphi 0, %s275
      %s276 = sphi 0, %s273
      %s277 = sphi 0, %s276
      %s293 = sphi 0, %s277
      %s299 = sphi 0, %s301
      %s302 = sphi 0, %s299
      %s303 = sphi 0, %s302
      %s319 = sphi 0, %s303
      %s325 = sphi 0, %s327
      %s328 = sphi 0, %s325
      %s329 = sphi 0, %s328
      %s345 = sphi 0, %s329
      %s351 = sphi 0, %s353
      %s354 = sphi 0, %s351
      %s355 = sphi 0, %s354
      %s371 = sphi 0, %s355
      %s377 = sphi 0, %s379
      %s380 = sphi 0, %s377
      %s381 = sphi 0, %s380
      %s397 = sphi 0, %s381
      %s403 = sphi 0, %s405
      %s406 = sphi 0, %s403
      %s407 = sphi 0, %s406
      %s423 = sphi 0, %s407
      %s429 = sphi 0, %s431
      %s432 = sphi 0, %s429
      %s433 = sphi 0, %s432
      %s449 = sphi 0, %s433
      %s453 = sphi 0, %s453
      %s455 = sphi 0, %s453
      %s456 = sphi 0, %s455
      %s470 = sphi 0, %s456
      %s474 = sphi 0, %s474
      %s476 = sphi 0, %s474
      %s477 = sphi 0, %s476
      %s491 = sphi 0, %s477
      %s495 = sphi 0, %s495
      %s497 = sphi 0, %s495
      %s498 = sphi 0, %s497
      %s512 = sphi 0, %s498
      %s516 = sphi 0, %s516
      %s518 = sphi 0, %s516
      %s519 = sphi 0, %s518
      %s533 = sphi 0, %s519
      %s537 = sphi 0, %s537
      %s539 = sphi 0, %s537
      %s540 = sphi 0, %s539
      %s554 = sphi 0, %s540
    $region4: #{tpu_custom_call.1} parent=1 // loop_header_branch
      %31 = sbr.rel (%p29) target = $region8
    $region5: #{tpu_custom_call.1} parent=1 // loop_body
      %s33 = ssub.s32 %s28, 1
      %s34 = ssub.s32 %s28, 2
      %s35 = sadd.s32 %s28, 1
      %s37 = sadd.s32 %s36, 1
      %p40 = scmp.eq.s32.totalorder %s28, 1
      %p41 = scmp.ne.s32.totalorder %s36, %s38
      %p42 = scmp.eq.s32.totalorder %s28, 0
      %p43 = por %p41, %p42
      %p44 = scmp.ne.s32.totalorder %s36, %s38
      %p45 = scmp.eq.s32.totalorder %s33, 1
      %p46 = por %p44, %p45
      %p47 = scmp.ne.s32.totalorder %s38, %s39
      %p48 = scmp.eq.s32.totalorder %s33, 0
      %p49 = por %p47, %p48
      %p50 = scmp.ne.s32.totalorder %s38, %s39
      %p51 = scmp.eq.s32.totalorder %s34, 1
      %p52 = por %p50, %p51
      %p54 = scmp.ne.s32.totalorder %s39, %s53
      %p55 = scmp.eq.s32.totalorder %s34, 0
      %p56 = por %p54, %p55
      %s58 = sadd.s32 %s57, 1
      %p61 = scmp.eq.s32.totalorder %s28, 1
      %p62 = scmp.ne.s32.totalorder %s57, %s59
      %p63 = scmp.eq.s32.totalorder %s28, 0
      %p64 = por %p62, %p63
      %p65 = scmp.ne.s32.totalorder %s57, %s59
      %p66 = scmp.eq.s32.totalorder %s33, 1
      %p67 = por %p65, %p66
      %p68 = scmp.ne.s32.totalorder %s59, %s60
      %p69 = scmp.eq.s32.totalorder %s33, 0
      %p70 = por %p68, %p69
      %p71 = scmp.ne.s32.totalorder %s59, %s60
      %p72 = scmp.eq.s32.totalorder %s34, 1
      %p73 = por %p71, %p72
      %p75 = scmp.ne.s32.totalorder %s60, %s74
      %p76 = scmp.eq.s32.totalorder %s34, 0
      %p77 = por %p75, %p76
      %s79 = sadd.s32 %s78, 1
      %p82 = scmp.eq.s32.totalorder %s28, 1
      %p83 = scmp.ne.s32.totalorder %s78, %s80
      %p84 = scmp.eq.s32.totalorder %s28, 0
      %p85 = por %p83, %p84
      %p86 = scmp.ne.s32.totalorder %s78, %s80
      %p87 = scmp.eq.s32.totalorder %s33, 1
      %p88 = por %p86, %p87
      %p89 = scmp.ne.s32.totalorder %s80, %s81
      %p90 = scmp.eq.s32.totalorder %s33, 0
      %p91 = por %p89, %p90
      %p92 = scmp.ne.s32.totalorder %s80, %s81
      %p93 = scmp.eq.s32.totalorder %s34, 1
      %p94 = por %p92, %p93
      %p96 = scmp.ne.s32.totalorder %s81, %s95
      %p97 = scmp.eq.s32.totalorder %s34, 0
      %p98 = por %p96, %p97
      %s100 = sadd.s32 %s99, 1
      %p103 = scmp.eq.s32.totalorder %s28, 1
      %p104 = scmp.ne.s32.totalorder %s99, %s101
      %p105 = scmp.eq.s32.totalorder %s28, 0
      %p106 = por %p104, %p105
      %p107 = scmp.ne.s32.totalorder %s99, %s101
      %p108 = scmp.eq.s32.totalorder %s33, 1
      %p109 = por %p107, %p108
      %p110 = scmp.ne.s32.totalorder %s101, %s102
      %p111 = scmp.eq.s32.totalorder %s33, 0
      %p112 = por %p110, %p111
      %p113 = scmp.ne.s32.totalorder %s101, %s102
      %p114 = scmp.eq.s32.totalorder %s34, 1
      %p115 = por %p113, %p114
      %p117 = scmp.ne.s32.totalorder %s102, %s116
      %p118 = scmp.eq.s32.totalorder %s34, 0
      %p119 = por %p117, %p118
      %s121 = sadd.s32 %s120, 1
      %p124 = scmp.eq.s32.totalorder %s28, 1
      %p125 = scmp.ne.s32.totalorder %s120, %s122
      %p126 = scmp.eq.s32.totalorder %s28, 0
      %p127 = por %p125, %p126
      %p128 = scmp.ne.s32.totalorder %s120, %s122
      %p129 = scmp.eq.s32.totalorder %s33, 1
      %p130 = por %p128, %p129
      %p131 = scmp.ne.s32.totalorder %s122, %s123
      %p132 = scmp.eq.s32.totalorder %s33, 0
      %p133 = por %p131, %p132
      %p134 = scmp.ne.s32.totalorder %s122, %s123
      %p135 = scmp.eq.s32.totalorder %s34, 1
      %p136 = por %p134, %p135
      %p138 = scmp.ne.s32.totalorder %s123, %s137
      %p139 = scmp.eq.s32.totalorder %s34, 0
      %p140 = por %p138, %p139
      %s141 = ssub.s32 %s28, %s35
      %p142 = scmp.eq.s32.totalorder %s141, 0
      %s144 = sadd.s32 %s143, 1
      %s145 = scalar_select %p142, %s143, %s144
      %p148 = pneg %p142
      %p149 = scmp.eq.s32.totalorder %s28, 1
      %p150 = por %p148, %p149
      %p151 = scmp.ne.s32.totalorder %s143, %s146
      %p152 = scmp.eq.s32.totalorder %s28, 0
      %p153 = por %p151, %p152
      %p154 = scmp.ne.s32.totalorder %s143, %s146
      %p155 = scmp.eq.s32.totalorder %s33, 1
      %p156 = por %p154, %p155
      %p157 = scmp.ne.s32.totalorder %s146, %s147
      %p158 = scmp.eq.s32.totalorder %s33, 0
      %p159 = por %p157, %p158
      %p160 = scmp.ne.s32.totalorder %s146, %s147
      %p161 = scmp.eq.s32.totalorder %s34, 1
      %p162 = por %p160, %p161
      %p164 = scmp.ne.s32.totalorder %s147, %s163
      %p165 = scmp.eq.s32.totalorder %s34, 0
      %p166 = por %p164, %p165
      %s167 = ssub.s32 %s28, %s35
      %p168 = scmp.eq.s32.totalorder %s167, 0
      %s170 = sadd.s32 %s169, 1
      %s171 = scalar_select %p168, %s169, %s170
      %p174 = pneg %p168
      %p175 = scmp.eq.s32.totalorder %s28, 1
      %p176 = por %p174, %p175
      %p177 = scmp.ne.s32.totalorder %s169, %s172
      %p178 = scmp.eq.s32.totalorder %s28, 0
      %p179 = por %p177, %p178
      %p180 = scmp.ne.s32.totalorder %s169, %s172
      %p181 = scmp.eq.s32.totalorder %s33, 1
      %p182 = por %p180, %p181
      %p183 = scmp.ne.s32.totalorder %s172, %s173
      %p184 = scmp.eq.s32.totalorder %s33, 0
      %p185 = por %p183, %p184
      %p186 = scmp.ne.s32.totalorder %s172, %s173
      %p187 = scmp.eq.s32.totalorder %s34, 1
      %p188 = por %p186, %p187
      %p190 = scmp.ne.s32.totalorder %s173, %s189
      %p191 = scmp.eq.s32.totalorder %s34, 0
      %p192 = por %p190, %p191
      %s193 = ssub.s32 %s28, %s35
      %p194 = scmp.eq.s32.totalorder %s193, 0
      %s196 = sadd.s32 %s195, 1
      %s197 = scalar_select %p194, %s195, %s196
      %p200 = pneg %p194
      %p201 = scmp.eq.s32.totalorder %s28, 1
      %p202 = por %p200, %p201
      %p203 = scmp.ne.s32.totalorder %s195, %s198
      %p204 = scmp.eq.s32.totalorder %s28, 0
      %p205 = por %p203, %p204
      %p206 = scmp.ne.s32.totalorder %s195, %s198
      %p207 = scmp.eq.s32.totalorder %s33, 1
      %p208 = por %p206, %p207
      %p209 = scmp.ne.s32.totalorder %s198, %s199
      %p210 = scmp.eq.s32.totalorder %s33, 0
      %p211 = por %p209, %p210
      %p212 = scmp.ne.s32.totalorder %s198, %s199
      %p213 = scmp.eq.s32.totalorder %s34, 1
      %p214 = por %p212, %p213
      %p216 = scmp.ne.s32.totalorder %s199, %s215
      %p217 = scmp.eq.s32.totalorder %s34, 0
      %p218 = por %p216, %p217
      %s219 = ssub.s32 %s28, %s35
      %p220 = scmp.eq.s32.totalorder %s219, 0
      %s222 = sadd.s32 %s221, 1
      %s223 = scalar_select %p220, %s221, %s222
      %p226 = pneg %p220
      %p227 = scmp.eq.s32.totalorder %s28, 1
      %p228 = por %p226, %p227
      %p229 = scmp.ne.s32.totalorder %s221, %s224
      %p230 = scmp.eq.s32.totalorder %s28, 0
      %p231 = por %p229, %p230
      %p232 = scmp.ne.s32.totalorder %s221, %s224
      %p233 = scmp.eq.s32.totalorder %s33, 1
      %p234 = por %p232, %p233
      %p235 = scmp.ne.s32.totalorder %s224, %s225
      %p236 = scmp.eq.s32.totalorder %s33, 0
      %p237 = por %p235, %p236
      %p238 = scmp.ne.s32.totalorder %s224, %s225
      %p239 = scmp.eq.s32.totalorder %s34, 1
      %p240 = por %p238, %p239
      %p242 = scmp.ne.s32.totalorder %s225, %s241
      %p243 = scmp.eq.s32.totalorder %s34, 0
      %p244 = por %p242, %p243
      %s245 = ssub.s32 %s28, %s35
      %p246 = scmp.eq.s32.totalorder %s245, 0
      %s248 = sadd.s32 %s247, 1
      %s249 = scalar_select %p246, %s247, %s248
      %p252 = pneg %p246
      %p253 = scmp.eq.s32.totalorder %s28, 1
      %p254 = por %p252, %p253
      %p255 = scmp.ne.s32.totalorder %s247, %s250
      %p256 = scmp.eq.s32.totalorder %s28, 0
      %p257 = por %p255, %p256
      %p258 = scmp.ne.s32.totalorder %s247, %s250
      %p259 = scmp.eq.s32.totalorder %s33, 1
      %p260 = por %p258, %p259
      %p261 = scmp.ne.s32.totalorder %s250, %s251
      %p262 = scmp.eq.s32.totalorder %s33, 0
      %p263 = por %p261, %p262
      %p264 = scmp.ne.s32.totalorder %s250, %s251
      %p265 = scmp.eq.s32.totalorder %s34, 1
      %p266 = por %p264, %p265
      %p268 = scmp.ne.s32.totalorder %s251, %s267
      %p269 = scmp.eq.s32.totalorder %s34, 0
      %p270 = por %p268, %p269
      %s271 = ssub.s32 %s28, %s35
      %p272 = scmp.eq.s32.totalorder %s271, 0
      %s274 = sadd.s32 %s273, 1
      %s275 = scalar_select %p272, %s273, %s274
      %p278 = pneg %p272
      %p279 = scmp.eq.s32.totalorder %s28, 1
      %p280 = por %p278, %p279
      %p281 = scmp.ne.s32.totalorder %s273, %s276
      %p282 = scmp.eq.s32.totalorder %s28, 0
      %p283 = por %p281, %p282
      %p284 = scmp.ne.s32.totalorder %s273, %s276
      %p285 = scmp.eq.s32.totalorder %s33, 1
      %p286 = por %p284, %p285
      %p287 = scmp.ne.s32.totalorder %s276, %s277
      %p288 = scmp.eq.s32.totalorder %s33, 0
      %p289 = por %p287, %p288
      %p290 = scmp.ne.s32.totalorder %s276, %s277
      %p291 = scmp.eq.s32.totalorder %s34, 1
      %p292 = por %p290, %p291
      %p294 = scmp.ne.s32.totalorder %s277, %s293
      %p295 = scmp.eq.s32.totalorder %s34, 0
      %p296 = por %p294, %p295
      %s297 = ssub.s32 %s28, %s35
      %p298 = scmp.eq.s32.totalorder %s297, 0
      %s300 = sadd.s32 %s299, 1
      %s301 = scalar_select %p298, %s299, %s300
      %p304 = pneg %p298
      %p305 = scmp.eq.s32.totalorder %s28, 1
      %p306 = por %p304, %p305
      %p307 = scmp.ne.s32.totalorder %s299, %s302
      %p308 = scmp.eq.s32.totalorder %s28, 0
      %p309 = por %p307, %p308
      %p310 = scmp.ne.s32.totalorder %s299, %s302
      %p311 = scmp.eq.s32.totalorder %s33, 1
      %p312 = por %p310, %p311
      %p313 = scmp.ne.s32.totalorder %s302, %s303
      %p314 = scmp.eq.s32.totalorder %s33, 0
      %p315 = por %p313, %p314
      %p316 = scmp.ne.s32.totalorder %s302, %s303
      %p317 = scmp.eq.s32.totalorder %s34, 1
      %p318 = por %p316, %p317
      %p320 = scmp.ne.s32.totalorder %s303, %s319
      %p321 = scmp.eq.s32.totalorder %s34, 0
      %p322 = por %p320, %p321
      %s323 = ssub.s32 %s28, %s35
      %p324 = scmp.eq.s32.totalorder %s323, 0
      %s326 = sadd.s32 %s325, 1
      %s327 = scalar_select %p324, %s325, %s326
      %p330 = pneg %p324
      %p331 = scmp.eq.s32.totalorder %s28, 1
      %p332 = por %p330, %p331
      %p333 = scmp.ne.s32.totalorder %s325, %s328
      %p334 = scmp.eq.s32.totalorder %s28, 0
      %p335 = por %p333, %p334
      %p336 = scmp.ne.s32.totalorder %s325, %s328
      %p337 = scmp.eq.s32.totalorder %s33, 1
      %p338 = por %p336, %p337
      %p339 = scmp.ne.s32.totalorder %s328, %s329
      %p340 = scmp.eq.s32.totalorder %s33, 0
      %p341 = por %p339, %p340
      %p342 = scmp.ne.s32.totalorder %s328, %s329
      %p343 = scmp.eq.s32.totalorder %s34, 1
      %p344 = por %p342, %p343
      %p346 = scmp.ne.s32.totalorder %s329, %s345
      %p347 = scmp.eq.s32.totalorder %s34, 0
      %p348 = por %p346, %p347
      %s349 = ssub.s32 %s28, %s35
      %p350 = scmp.eq.s32.totalorder %s349, 0
      %s352 = sadd.s32 %s351, 1
      %s353 = scalar_select %p350, %s351, %s352
      %p356 = pneg %p350
      %p357 = scmp.eq.s32.totalorder %s28, 1
      %p358 = por %p356, %p357
      %p359 = scmp.ne.s32.totalorder %s351, %s354
      %p360 = scmp.eq.s32.totalorder %s28, 0
      %p361 = por %p359, %p360
      %p362 = scmp.ne.s32.totalorder %s351, %s354
      %p363 = scmp.eq.s32.totalorder %s33, 1
      %p364 = por %p362, %p363
      %p365 = scmp.ne.s32.totalorder %s354, %s355
      %p366 = scmp.eq.s32.totalorder %s33, 0
      %p367 = por %p365, %p366
      %p368 = scmp.ne.s32.totalorder %s354, %s355
      %p369 = scmp.eq.s32.totalorder %s34, 1
      %p370 = por %p368, %p369
      %p372 = scmp.ne.s32.totalorder %s355, %s371
      %p373 = scmp.eq.s32.totalorder %s34, 0
      %p374 = por %p372, %p373
      %s375 = ssub.s32 %s28, %s35
      %p376 = scmp.eq.s32.totalorder %s375, 0
      %s378 = sadd.s32 %s377, 1
      %s379 = scalar_select %p376, %s377, %s378
      %p382 = pneg %p376
      %p383 = scmp.eq.s32.totalorder %s28, 1
      %p384 = por %p382, %p383
      %p385 = scmp.ne.s32.totalorder %s377, %s380
      %p386 = scmp.eq.s32.totalorder %s28, 0
      %p387 = por %p385, %p386
      %p388 = scmp.ne.s32.totalorder %s377, %s380
      %p389 = scmp.eq.s32.totalorder %s33, 1
      %p390 = por %p388, %p389
      %p391 = scmp.ne.s32.totalorder %s380, %s381
      %p392 = scmp.eq.s32.totalorder %s33, 0
      %p393 = por %p391, %p392
      %p394 = scmp.ne.s32.totalorder %s380, %s381
      %p395 = scmp.eq.s32.totalorder %s34, 1
      %p396 = por %p394, %p395
      %p398 = scmp.ne.s32.totalorder %s381, %s397
      %p399 = scmp.eq.s32.totalorder %s34, 0
      %p400 = por %p398, %p399
      %s401 = ssub.s32 %s28, %s35
      %p402 = scmp.eq.s32.totalorder %s401, 0
      %s404 = sadd.s32 %s403, 1
      %s405 = scalar_select %p402, %s403, %s404
      %p408 = pneg %p402
      %p409 = scmp.eq.s32.totalorder %s28, 1
      %p410 = por %p408, %p409
      %p411 = scmp.ne.s32.totalorder %s403, %s406
      %p412 = scmp.eq.s32.totalorder %s28, 0
      %p413 = por %p411, %p412
      %p414 = scmp.ne.s32.totalorder %s403, %s406
      %p415 = scmp.eq.s32.totalorder %s33, 1
      %p416 = por %p414, %p415
      %p417 = scmp.ne.s32.totalorder %s406, %s407
      %p418 = scmp.eq.s32.totalorder %s33, 0
      %p419 = por %p417, %p418
      %p420 = scmp.ne.s32.totalorder %s406, %s407
      %p421 = scmp.eq.s32.totalorder %s34, 1
      %p422 = por %p420, %p421
      %p424 = scmp.ne.s32.totalorder %s407, %s423
      %p425 = scmp.eq.s32.totalorder %s34, 0
      %p426 = por %p424, %p425
      %s427 = ssub.s32 %s28, %s35
      %p428 = scmp.eq.s32.totalorder %s427, 0
      %s430 = sadd.s32 %s429, 1
      %s431 = scalar_select %p428, %s429, %s430
      %p434 = pneg %p428
      %p435 = scmp.eq.s32.totalorder %s28, 1
      %p436 = por %p434, %p435
      %p437 = scmp.ne.s32.totalorder %s429, %s432
      %p438 = scmp.eq.s32.totalorder %s28, 0
      %p439 = por %p437, %p438
      %p440 = scmp.ne.s32.totalorder %s429, %s432
      %p441 = scmp.eq.s32.totalorder %s33, 1
      %p442 = por %p440, %p441
      %p443 = scmp.ne.s32.totalorder %s432, %s433
      %p444 = scmp.eq.s32.totalorder %s33, 0
      %p445 = por %p443, %p444
      %p446 = scmp.ne.s32.totalorder %s432, %s433
      %p447 = scmp.eq.s32.totalorder %s34, 1
      %p448 = por %p446, %p447
      %p450 = scmp.ne.s32.totalorder %s433, %s449
      %p451 = scmp.eq.s32.totalorder %s34, 0
      %p452 = por %p450, %p451
      %s454 = sadd.s32 %s453, 1
      %p457 = scmp.eq.s32.totalorder %s28, 1
      %p458 = scmp.ne.s32.totalorder %s453, %s455
      %p459 = scmp.eq.s32.totalorder %s28, 0
      %p460 = por %p458, %p459
      %p461 = scmp.ne.s32.totalorder %s453, %s455
      %p462 = scmp.eq.s32.totalorder %s33, 1
      %p463 = por %p461, %p462
      %p464 = scmp.ne.s32.totalorder %s455, %s456
      %p465 = scmp.eq.s32.totalorder %s33, 0
      %p466 = por %p464, %p465
      %p467 = scmp.ne.s32.totalorder %s455, %s456
      %p468 = scmp.eq.s32.totalorder %s34, 1
      %p469 = por %p467, %p468
      %p471 = scmp.ne.s32.totalorder %s456, %s470
      %p472 = scmp.eq.s32.totalorder %s34, 0
      %p473 = por %p471, %p472
      %s475 = sadd.s32 %s474, 1
      %p478 = scmp.eq.s32.totalorder %s28, 1
      %p479 = scmp.ne.s32.totalorder %s474, %s476
      %p480 = scmp.eq.s32.totalorder %s28, 0
      %p481 = por %p479, %p480
      %p482 = scmp.ne.s32.totalorder %s474, %s476
      %p483 = scmp.eq.s32.totalorder %s33, 1
      %p484 = por %p482, %p483
      %p485 = scmp.ne.s32.totalorder %s476, %s477
      %p486 = scmp.eq.s32.totalorder %s33, 0
      %p487 = por %p485, %p486
      %p488 = scmp.ne.s32.totalorder %s476, %s477
      %p489 = scmp.eq.s32.totalorder %s34, 1
      %p490 = por %p488, %p489
      %p492 = scmp.ne.s32.totalorder %s477, %s491
      %p493 = scmp.eq.s32.totalorder %s34, 0
      %p494 = por %p492, %p493
      %s496 = sadd.s32 %s495, 1
      %p499 = scmp.eq.s32.totalorder %s28, 1
      %p500 = scmp.ne.s32.totalorder %s495, %s497
      %p501 = scmp.eq.s32.totalorder %s28, 0
      %p502 = por %p500, %p501
      %p503 = scmp.ne.s32.totalorder %s495, %s497
      %p504 = scmp.eq.s32.totalorder %s33, 1
      %p505 = por %p503, %p504
      %p506 = scmp.ne.s32.totalorder %s497, %s498
      %p507 = scmp.eq.s32.totalorder %s33, 0
      %p508 = por %p506, %p507
      %p509 = scmp.ne.s32.totalorder %s497, %s498
      %p510 = scmp.eq.s32.totalorder %s34, 1
      %p511 = por %p509, %p510
      %p513 = scmp.ne.s32.totalorder %s498, %s512
      %p514 = scmp.eq.s32.totalorder %s34, 0
      %p515 = por %p513, %p514
      %s517 = sadd.s32 %s516, 1
      %p520 = scmp.eq.s32.totalorder %s28, 1
      %p521 = scmp.ne.s32.totalorder %s516, %s518
      %p522 = scmp.eq.s32.totalorder %s28, 0
      %p523 = por %p521, %p522
      %p524 = scmp.ne.s32.totalorder %s516, %s518
      %p525 = scmp.eq.s32.totalorder %s33, 1
      %p526 = por %p524, %p525
      %p527 = scmp.ne.s32.totalorder %s518, %s519
      %p528 = scmp.eq.s32.totalorder %s33, 0
      %p529 = por %p527, %p528
      %p530 = scmp.ne.s32.totalorder %s518, %s519
      %p531 = scmp.eq.s32.totalorder %s34, 1
      %p532 = por %p530, %p531
      %p534 = scmp.ne.s32.totalorder %s519, %s533
      %p535 = scmp.eq.s32.totalorder %s34, 0
      %p536 = por %p534, %p535
      %s538 = sadd.s32 %s537, 1
      %p541 = scmp.eq.s32.totalorder %s28, 1
      %p542 = scmp.ne.s32.totalorder %s537, %s539
      %p543 = scmp.eq.s32.totalorder %s28, 0
      %p544 = por %p542, %p543
      %p545 = scmp.ne.s32.totalorder %s537, %s539
      %p546 = scmp.eq.s32.totalorder %s33, 1
      %p547 = por %p545, %p546
      %p548 = scmp.ne.s32.totalorder %s539, %s540
      %p549 = scmp.eq.s32.totalorder %s33, 0
      %p550 = por %p548, %p549
      %p551 = scmp.ne.s32.totalorder %s539, %s540
      %p552 = scmp.eq.s32.totalorder %s34, 1
      %p553 = por %p551, %p552
      %p555 = scmp.ne.s32.totalorder %s540, %s554
      %p556 = scmp.eq.s32.totalorder %s34, 0
      %p557 = por %p555, %p556
      %p558 = scmp.le.s32.totalorder 1, %s28
      %p559 = scmp.lt.s32.totalorder %s28, 3
      %p560 = pnand %p558, %p559
      %p561 = pneg %p560
      // Predicated region
      $region9: #{tpu_custom_call.1} parent=5 // pred_check
        _
      $region10: #{tpu_custom_call.1} parent=5 // pred_check_branch
        %563 = sbr.rel (%p560) target = $region12
      $region11: #{tpu_custom_call.1} parent=5 // pred_region
        %s564 = ssub.s32 %s28, 1
        // Predicated region
        $region13: #{tpu_custom_call.1} parent=11 // pred_check
          %p565 = pneg %p49
        $region14: #{tpu_custom_call.1} parent=11 // pred_check_branch
          %567 = sbr.rel (%p565) target = $region16
        $region15: #{tpu_custom_call.1} parent=11 // pred_region
          _
        $region16: #{tpu_custom_call.1} parent=11 // pred_fallthru
          _
        // Predicated region
        $region17: #{tpu_custom_call.1} parent=11 // pred_check
          %p568 = pneg %p70
        $region18: #{tpu_custom_call.1} parent=11 // pred_check_branch
          %570 = sbr.rel (%p568) target = $region20
        $region19: #{tpu_custom_call.1} parent=11 // pred_region
          _
        $region20: #{tpu_custom_call.1} parent=11 // pred_fallthru
          _
        // Predicated region
        $region21: #{tpu_custom_call.1} parent=11 // pred_check
          %p571 = pneg %p91
        $region22: #{tpu_custom_call.1} parent=11 // pred_check_branch
          %573 = sbr.rel (%p571) target = $region24
        $region23: #{tpu_custom_call.1} parent=11 // pred_region
          _
        $region24: #{tpu_custom_call.1} parent=11 // pred_fallthru
          _
        // Predicated region
        $region25: #{tpu_custom_call.1} parent=11 // pred_check
          %p574 = pneg %p112
        $region26: #{tpu_custom_call.1} parent=11 // pred_check_branch
          %576 = sbr.rel (%p574) target = $region28
        $region27: #{tpu_custom_call.1} parent=11 // pred_region
          _
        $region28: #{tpu_custom_call.1} parent=11 // pred_fallthru
          _
        // Predicated region
        $region29: #{tpu_custom_call.1} parent=11 // pred_check
          %p577 = pneg %p133
        $region30: #{tpu_custom_call.1} parent=11 // pred_check_branch
          %579 = sbr.rel (%p577) target = $region32
        $region31: #{tpu_custom_call.1} parent=11 // pred_region
          _
        $region32: #{tpu_custom_call.1} parent=11 // pred_fallthru
          _
        // Predicated region
        $region33: #{tpu_custom_call.1} parent=11 // pred_check
          %p580 = pneg %p466
        $region34: #{tpu_custom_call.1} parent=11 // pred_check_branch
          %582 = sbr.rel (%p580) target = $region36
        $region35: #{tpu_custom_call.1} parent=11 // pred_region
          _
        $region36: #{tpu_custom_call.1} parent=11 // pred_fallthru
          _
        // Predicated region
        $region37: #{tpu_custom_call.1} parent=11 // pred_check
          %p583 = pneg %p487
        $region38: #{tpu_custom_call.1} parent=11 // pred_check_branch
          %585 = sbr.rel (%p583) target = $region40
        $region39: #{tpu_custom_call.1} parent=11 // pred_region
          _
        $region40: #{tpu_custom_call.1} parent=11 // pred_fallthru
          _
        // Predicated region
        $region41: #{tpu_custom_call.1} parent=11 // pred_check
          %p586 = pneg %p508
        $region42: #{tpu_custom_call.1} parent=11 // pred_check_branch
          %588 = sbr.rel (%p586) target = $region44
        $region43: #{tpu_custom_call.1} parent=11 // pred_region
          _
        $region44: #{tpu_custom_call.1} parent=11 // pred_fallthru
          _
        // Predicated region
        $region45: #{tpu_custom_call.1} parent=11 // pred_check
          %p589 = pneg %p529
        $region46: #{tpu_custom_call.1} parent=11 // pred_check_branch
          %591 = sbr.rel (%p589) target = $region48
        $region47: #{tpu_custom_call.1} parent=11 // pred_region
          _
        $region48: #{tpu_custom_call.1} parent=11 // pred_fallthru
          _
      $region12: #{tpu_custom_call.1} parent=5 // pred_fallthru
        _
      %p592 = scmp.lt.s32.totalorder %s28, 2
      // Predicated region
      $region49: #{tpu_custom_call.1} parent=5 // pred_check
        %p593 = pneg %p592
      $region50: #{tpu_custom_call.1} parent=5 // pred_check_branch
        %595 = sbr.rel (%p593) target = $region52
      $region51: #{tpu_custom_call.1} parent=5 // pred_region
        // Predicated region
        $region53: #{tpu_custom_call.1} parent=51 // pred_check
          %p596 = pneg %p153
        $region54: #{tpu_custom_call.1} parent=51 // pred_check_branch
          %598 = sbr.rel (%p596) target = $region56
        $region55: #{tpu_custom_call.1} parent=51 // pred_region
          %p599 = scmp.lt.s32.totalorder %s28, 1
          %s600 = scalar_select %p599, %s28, 1
          %s601 = scalar_lea.vmem %s5, %s600
        $region56: #{tpu_custom_call.1} parent=51 // pred_fallthru
          _
        // Predicated region
        $region57: #{tpu_custom_call.1} parent=51 // pred_check
          %p602 = pneg %p179
        $region58: #{tpu_custom_call.1} parent=51 // pred_check_branch
          %604 = sbr.rel (%p602) target = $region60
        $region59: #{tpu_custom_call.1} parent=51 // pred_region
          %p605 = scmp.lt.s32.totalorder %s28, 1
          %s606 = scalar_select %p605, %s28, 1
          %s607 = scalar_lea.vmem %s6, %s606
        $region60: #{tpu_custom_call.1} parent=51 // pred_fallthru
          _
        // Predicated region
        $region61: #{tpu_custom_call.1} parent=51 // pred_check
          %p608 = pneg %p205
        $region62: #{tpu_custom_call.1} parent=51 // pred_check_branch
          %610 = sbr.rel (%p608) target = $region64
        $region63: #{tpu_custom_call.1} parent=51 // pred_region
          %p611 = scmp.lt.s32.totalorder %s28, 1
          %s612 = scalar_select %p611, %s28, 1
          %s613 = smul.addr %s612, 4
          %s614 = smul.addr %s613, 4
          %s615 = scalar_lea.vmem %s7, %s614
        $region64: #{tpu_custom_call.1} parent=51 // pred_fallthru
          _
        // Predicated region
        $region65: #{tpu_custom_call.1} parent=51 // pred_check
          %p616 = pneg %p231
        $region66: #{tpu_custom_call.1} parent=51 // pred_check_branch
          %618 = sbr.rel (%p616) target = $region68
        $region67: #{tpu_custom_call.1} parent=51 // pred_region
          %p619 = scmp.lt.s32.totalorder %s28, 1
          %s620 = scalar_select %p619, %s28, 1
          %s621 = scalar_lea.vmem %s8, %s620
        $region68: #{tpu_custom_call.1} parent=51 // pred_fallthru
          _
        // Predicated region
        $region69: #{tpu_custom_call.1} parent=51 // pred_check
          %p622 = pneg %p257
        $region70: #{tpu_custom_call.1} parent=51 // pred_check_branch
          %624 = sbr.rel (%p622) target = $region72
        $region71: #{tpu_custom_call.1} parent=51 // pred_region
          %p625 = scmp.lt.s32.totalorder %s28, 1
          %s626 = scalar_select %p625, %s28, 1
          %s627 = smul.addr %s626, 4
          %s628 = smul.addr %s627, 4
          %s629 = scalar_lea.vmem %s9, %s628
        $region72: #{tpu_custom_call.1} parent=51 // pred_fallthru
          _
        // Predicated region
        $region73: #{tpu_custom_call.1} parent=51 // pred_check
          %p630 = pneg %p283
        $region74: #{tpu_custom_call.1} parent=51 // pred_check_branch
          %632 = sbr.rel (%p630) target = $region76
        $region75: #{tpu_custom_call.1} parent=51 // pred_region
          %p633 = scmp.lt.s32.totalorder %s28, 1
          %s634 = scalar_select %p633, %s28, 1
          %s635 = scalar_lea.vmem %s10, %s634
        $region76: #{tpu_custom_call.1} parent=51 // pred_fallthru
          _
        // Predicated region
        $region77: #{tpu_custom_call.1} parent=51 // pred_check
          %p636 = pneg %p309
        $region78: #{tpu_custom_call.1} parent=51 // pred_check_branch
          %638 = sbr.rel (%p636) target = $region80
        $region79: #{tpu_custom_call.1} parent=51 // pred_region
          %p639 = scmp.lt.s32.totalorder %s28, 1
          %s640 = scalar_select %p639, %s28, 1
          %s641 = scalar_lea.vmem %s11, %s640
        $region80: #{tpu_custom_call.1} parent=51 // pred_fallthru
          _
        // Predicated region
        $region81: #{tpu_custom_call.1} parent=51 // pred_check
          %p642 = pneg %p335
        $region82: #{tpu_custom_call.1} parent=51 // pred_check_branch
          %644 = sbr.rel (%p642) target = $region84
        $region83: #{tpu_custom_call.1} parent=51 // pred_region
          %p645 = scmp.lt.s32.totalorder %s28, 1
          %s646 = scalar_select %p645, %s28, 1
          %s647 = scalar_lea.vmem %s12, %s646
        $region84: #{tpu_custom_call.1} parent=51 // pred_fallthru
          _
        // Predicated region
        $region85: #{tpu_custom_call.1} parent=51 // pred_check
          %p648 = pneg %p361
        $region86: #{tpu_custom_call.1} parent=51 // pred_check_branch
          %650 = sbr.rel (%p648) target = $region88
        $region87: #{tpu_custom_call.1} parent=51 // pred_region
          %p651 = scmp.lt.s32.totalorder %s28, 1
          %s652 = scalar_select %p651, %s28, 1
          %s653 = smul.addr %s652, 4
          %s654 = smul.addr %s653, 4
          %s655 = scalar_lea.vmem %s13, %s654
        $region88: #{tpu_custom_call.1} parent=51 // pred_fallthru
          _
        // Predicated region
        $region89: #{tpu_custom_call.1} parent=51 // pred_check
          %p656 = pneg %p387
        $region90: #{tpu_custom_call.1} parent=51 // pred_check_branch
          %658 = sbr.rel (%p656) target = $region92
        $region91: #{tpu_custom_call.1} parent=51 // pred_region
          %p659 = scmp.lt.s32.totalorder %s28, 1
          %s660 = scalar_select %p659, %s28, 1
          %s661 = scalar_lea.vmem %s14, %s660
        $region92: #{tpu_custom_call.1} parent=51 // pred_fallthru
          _
        // Predicated region
        $region93: #{tpu_custom_call.1} parent=51 // pred_check
          %p662 = pneg %p413
        $region94: #{tpu_custom_call.1} parent=51 // pred_check_branch
          %664 = sbr.rel (%p662) target = $region96
        $region95: #{tpu_custom_call.1} parent=51 // pred_region
          %p665 = scmp.lt.s32.totalorder %s28, 1
          %s666 = scalar_select %p665, %s28, 1
          %s667 = smul.addr %s666, 16
          %s668 = smul.addr %s667, 4
          %s669 = scalar_lea.vmem %s15, %s668
        $region96: #{tpu_custom_call.1} parent=51 // pred_fallthru
          _
        // Predicated region
        $region97: #{tpu_custom_call.1} parent=51 // pred_check
          %p670 = pneg %p439
        $region98: #{tpu_custom_call.1} parent=51 // pred_check_branch
          %672 = sbr.rel (%p670) target = $region100
        $region99: #{tpu_custom_call.1} parent=51 // pred_region
          %p673 = scmp.lt.s32.totalorder %s28, 1
          %s674 = scalar_select %p673, %s28, 1
          %s675 = scalar_lea.vmem %s16, %s674
        $region100: #{tpu_custom_call.1} parent=51 // pred_fallthru
          _
      $region52: #{tpu_custom_call.1} parent=5 // pred_fallthru
        _
      %p676 = scmp.le.s32.totalorder 1, %s28
      %p677 = scmp.lt.s32.totalorder %s28, 3
      %p678 = pnand %p676, %p677
      %p679 = pneg %p678
      // Predicated region
      $region101: #{tpu_custom_call.1} parent=5 // pred_check
        _
      $region102: #{tpu_custom_call.1} parent=5 // pred_check_branch
        %681 = sbr.rel (%p678) target = $region104
      $region103: #{tpu_custom_call.1} parent=5 // pred_region
        %s682 = ssub.s32 %s28, 1
        %p683 = pneg %p49
        %p684 = pneg %p46
        %p685 = pneg %p70
        %p686 = pneg %p67
        %p687 = pneg %p91
        %p688 = pneg %p88
        %p689 = pneg %p112
        %p690 = pneg %p109
        %p691 = pneg %p133
        %p692 = pneg %p130
        %p693 = scmp.lt.s32.totalorder %s33, 1
        %s694 = scalar_select %p693, %s33, 1
        %s695 = scalar_lea.vmem %s5, %s694
        %p696 = pneg %p159
        %p697 = pneg %p156
        %p698 = scmp.lt.s32.totalorder %s33, 1
        %s699 = scalar_select %p698, %s33, 1
        %s700 = scalar_lea.vmem %s6, %s699
        %p701 = pneg %p185
        %p702 = pneg %p182
        %p703 = scmp.lt.s32.totalorder %s33, 1
        %s704 = scalar_select %p703, %s33, 1
        %s705 = smul.addr %s704, 4
        %s706 = smul.addr %s705, 4
        %s707 = scalar_lea.vmem %s7, %s706
        %p708 = pneg %p211
        %p709 = pneg %p208
        %p710 = scmp.lt.s32.totalorder %s33, 1
        %s711 = scalar_select %p710, %s33, 1
        %s712 = scalar_lea.vmem %s8, %s711
        %p713 = pneg %p237
        %p714 = pneg %p234
        %p715 = scmp.lt.s32.totalorder %s33, 1
        %s716 = scalar_select %p715, %s33, 1
        %s717 = smul.addr %s716, 4
        %s718 = smul.addr %s717, 4
        %s719 = scalar_lea.vmem %s9, %s718
        %p720 = pneg %p263
        %p721 = pneg %p260
        %p722 = scmp.lt.s32.totalorder %s33, 1
        %s723 = scalar_select %p722, %s33, 1
        %s724 = scalar_lea.vmem %s10, %s723
        %p725 = pneg %p289
        %p726 = pneg %p286
        %p727 = scmp.lt.s32.totalorder %s33, 1
        %s728 = scalar_select %p727, %s33, 1
        %s729 = scalar_lea.vmem %s11, %s728
        %p730 = pneg %p315
        %p731 = pneg %p312
        %p732 = scmp.lt.s32.totalorder %s33, 1
        %s733 = scalar_select %p732, %s33, 1
        %s734 = scalar_lea.vmem %s12, %s733
        %p735 = pneg %p341
        %p736 = pneg %p338
        %p737 = scmp.lt.s32.totalorder %s33, 1
        %s738 = scalar_select %p737, %s33, 1
        %s739 = smul.addr %s738, 4
        %s740 = smul.addr %s739, 4
        %s741 = scalar_lea.vmem %s13, %s740
        %p742 = pneg %p367
        %p743 = pneg %p364
        %p744 = scmp.lt.s32.totalorder %s33, 1
        %s745 = scalar_select %p744, %s33, 1
        %s746 = scalar_lea.vmem %s14, %s745
        %p747 = pneg %p393
        %p748 = pneg %p390
        %p749 = scmp.lt.s32.totalorder %s33, 1
        %s750 = scalar_select %p749, %s33, 1
        %s751 = smul.addr %s750, 16
        %s752 = smul.addr %s751, 4
        %s753 = scalar_lea.vmem %s15, %s752
        %p754 = pneg %p419
        %p755 = pneg %p416
        %p756 = scmp.lt.s32.totalorder %s33, 1
        %s757 = scalar_select %p756, %s33, 1
        %s758 = scalar_lea.vmem %s16, %s757
        %p759 = pneg %p445
        %p760 = pneg %p442
        %p761 = pneg %p466
        %p762 = pneg %p463
        %p763 = pneg %p487
        %p764 = pneg %p484
        %p765 = pneg %p508
        %p766 = pneg %p505
        %p767 = pneg %p529
        %p768 = pneg %p526
        %p769 = pneg %p550
        %p770 = pneg %p547
        %p771 = scmp.lt.s32.totalorder %s33, 1
        %s772 = scalar_select %p771, %s33, 1
        %s773 = scalar_lea.vmem %s5, %s772
        %p774 = scmp.lt.s32.totalorder %s33, 1
        %s775 = scalar_select %p774, %s33, 1
        %s776 = scalar_lea.vmem %s6, %s775
        %p777 = scmp.lt.s32.totalorder %s33, 1
        %s778 = scalar_select %p777, %s33, 1
        %s779 = smul.addr %s778, 4
        %s780 = smul.addr %s779, 4
        %s781 = scalar_lea.vmem %s7, %s780
        %p782 = scmp.lt.s32.totalorder %s33, 1
        %s783 = scalar_select %p782, %s33, 1
        %s784 = scalar_lea.vmem %s8, %s783
        %p785 = scmp.lt.s32.totalorder %s33, 1
        %s786 = scalar_select %p785, %s33, 1
        %s787 = smul.addr %s786, 4
        %s788 = smul.addr %s787, 4
        %s789 = scalar_lea.vmem %s9, %s788
        %p790 = scmp.lt.s32.totalorder %s33, 1
        %s791 = scalar_select %p790, %s33, 1
        %s792 = scalar_lea.vmem %s10, %s791
        %p793 = scmp.lt.s32.totalorder %s33, 1
        %s794 = scalar_select %p793, %s33, 1
        %s795 = scalar_lea.vmem %s11, %s794
        %p796 = scmp.lt.s32.totalorder %s33, 1
        %s797 = scalar_select %p796, %s33, 1
        %s798 = scalar_lea.vmem %s12, %s797
        %p799 = scmp.lt.s32.totalorder %s33, 1
        %s800 = scalar_select %p799, %s33, 1
        %s801 = smul.addr %s800, 4
        %s802 = smul.addr %s801, 4
        %s803 = scalar_lea.vmem %s13, %s802
        %p804 = scmp.lt.s32.totalorder %s33, 1
        %s805 = scalar_select %p804, %s33, 1
        %s806 = scalar_lea.vmem %s14, %s805
        %p807 = scmp.lt.s32.totalorder %s33, 1
        %s808 = scalar_select %p807, %s33, 1
        %s809 = smul.addr %s808, 16
        %s810 = smul.addr %s809, 4
        %s811 = scalar_lea.vmem %s15, %s810
        %p812 = scmp.lt.s32.totalorder %s33, 1
        %s813 = scalar_select %p812, %s33, 1
        %s814 = scalar_lea.vmem %s16, %s813
        %p816 = scmp.eq.s32.totalorder %s33, 0
        // Predicated region
        $region105: #{tpu_custom_call.1} parent=103 // pred_check
          %p817 = pneg %p816
        $region106: #{tpu_custom_call.1} parent=103 // pred_check_branch
          %819 = sbr.rel (%p817) target = $region108
        $region107: #{tpu_custom_call.1} parent=103 // pred_region
          %v820 = vld [vmem:[%s0] sm:$0xf]
          %v821 = vld [vmem:[%s0 + $0x4] sm:$0xf]
          %v822 = vld [vmem:[%s0 + $0x8] sm:$0xf]
          %v823 = vld [vmem:[%s0 + $0xc] sm:$0xf]
          %v824 = vld [vmem:[%s1] sm:$0xf]
          %v825 = vld [vmem:[%s1 + $0x4] sm:$0xf]
          %v826 = vld [vmem:[%s1 + $0x8] sm:$0xf]
          %v827 = vld [vmem:[%s1 + $0xc] sm:$0xf]
          %v828 = vld [vmem:[%s1 + $0x10] sm:$0xf]
          %v829 = vld [vmem:[%s1 + $0x14] sm:$0xf]
          %v830 = vld [vmem:[%s2] sm:$0x1]
          %v832 = vperm.slane %v830, 0
          %v838 = vunpack.c.l.b16 %v820
          %v839 = vunpack.c.l.b16 %v821
          %v840 = vunpack.c.l.b16 %v822
          %v841 = vunpack.c.l.b16 %v823
          %v842 = vpack.c.b16 %v839, %v838
          %v843 = vpack.c.b16 %v841, %v840
          %v850 = vunpack.c.l.b16 %v824
          %v851 = vunpack.c.l.b16 %v825
          %v852 = vunpack.c.l.b16 %v826
          %v853 = vunpack.c.l.b16 %v827
          %v854 = vunpack.c.l.b16 %v828
          %v855 = vunpack.c.l.b16 %v829
          %v856 = vpack.c.b16 %v851, %v850
          %v857 = vpack.c.b16 %v853, %v852
          %v858 = vpack.c.b16 %v855, %v854
          %vm862 = vcmask 392192
          %v864 = vsel %vm862, %v842, 0
          %v867 = vsel %vm862, %v843, 0
          %869 = vmatpush.bf16.msra.mxu0 0
          %870 = vmatpush.bf16.msra.mxu0 0
          %871 = vmatpush.bf16.msra.mxu0 0
          %872 = vmatpush.bf16.msra.mxu0 0
          %873 = vmatpush.bf16.msra.mxu0 0
          %874 = vmatpush.bf16.msra.mxu0 %v858
          %875 = vmatpush.bf16.msra.mxu0 %v857
          %876 = vmatpush.bf16.msra.mxu0 %v856
          %877 = vmatmul.bf16.gmra.mxu0 %v864
          %v878 = vpop.f32.mrf.mxu0
          %v879 = vadd.f32 %v832, %v878
          %v880 = vpop.f32.mrf.mxu0
          %v881 = vadd.f32 %v832, %v880
          %882 = vmatmul.bf16.gmra.mxu0 %v867
          %v883 = vpop.f32.mrf.mxu0
          %v884 = vadd.f32 %v832, %v883
          %v885 = vpop.f32.mrf.mxu0
          %v886 = vadd.f32 %v832, %v885
          %887 = vdwg.mxu0
          %v888 = vld [vmem:[%s3] sm:$0x1]
          %v889 = vld [vmem:[%s4] sm:$0xff]
          %v890 = vld [vmem:[%s4 + $0x8] sm:$0xff]
          %v891 = vadd.f32 %v879, %v889
          %v892 = vadd.f32 %v881, %v890
          %v893 = vadd.f32 %v884, %v889
          %v894 = vadd.f32 %v886, %v890
          %vm897 = vcmask 1040384
          %v898 = vrot.slane %v891, 7
          %v899 = vrot.slane %v892, 7
          %v900 = vsel %vm897, %v898, %v899
          %v906 = vrot.slane %v893, 7
          %v907 = vrot.slane %v894, 7
          %v908 = vsel %vm897, %v906, %v907
          %v912 = vsel %vm897, %v888, %v898
          %v913 = vsel %vm897, %v899, 0.0
          %v914 = vsel %vm897, %v888, %v906
          %v915 = vsel %vm897, %v907, 0.0
          %vm916 = vcmask 261120
          %917 = vst.msk [vmem:[#allocation2] sm:$0xff] %vm916, %v912
          %918 = vst.msk [vmem:[#allocation2 + $0x8] sm:$0xff] %vm916, %v900
          %919 = vst.msk [vmem:[#allocation2 + $0x10] sm:$0xff] %vm916, %v913
          %920 = vst.msk [vmem:[#allocation2 + $0x18] sm:$0xff] %vm916, %v914
          %921 = vst.msk [vmem:[#allocation2 + $0x20] sm:$0xff] %vm916, %v908
          %922 = vst.msk [vmem:[#allocation2 + $0x28] sm:$0xff] %vm916, %v915
        $region108: #{tpu_custom_call.1} parent=103 // pred_fallthru
          _
        %v923 = vlaneseq
        %v924 = vand.u32 %v923, 127
        %vm925 = vcmp.lt.s32.totalorder %v924, 17
        %v926 = vsel %vm925, 0.0, -1e+30
        %v927 = vld [vmem:[#allocation2] sm:$0xff]
        %v928 = vld [vmem:[#allocation2 + $0x8] sm:$0xff]
        %v929 = vld [vmem:[#allocation2 + $0x10] sm:$0xff]
        %v930 = vld [vmem:[#allocation2 + $0x18] sm:$0xff]
        %v931 = vld [vmem:[#allocation2 + $0x20] sm:$0xff]
        %v932 = vld [vmem:[#allocation2 + $0x28] sm:$0xff]
        %v933 = vld [vmem:[%s773] sm:$0x1]
        %v934 = vld [vmem:[%s776] sm:$0x1]
        %vm935 = vcmask 261120
        %v936 = vsel %vm935, %v927, 0.0
        %937 = vadd.xlane.f32.xlu0 %v936
        %v938 = vpop.xlane.xlu0 %937
        %v939 = vsel %vm935, %v928, 0.0
        %940 = vadd.xlane.f32.xlu0 %v939
        %v941 = vpop.xlane.xlu0 %940
        %v942 = vsel %vm935, %v929, 0.0
        %943 = vadd.xlane.f32.xlu0 %v942
        %v944 = vpop.xlane.xlu0 %943
        %v945 = vsel %vm935, %v930, 0.0
        %946 = vadd.xlane.f32.xlu0 %v945
        %v947 = vpop.xlane.xlu0 %946
        %v948 = vsel %vm935, %v931, 0.0
        %949 = vadd.xlane.f32.xlu0 %v948
        %v950 = vpop.xlane.xlu0 %949
        %v951 = vsel %vm935, %v932, 0.0
        %952 = vadd.xlane.f32.xlu0 %v951
        %v953 = vpop.xlane.xlu0 %952
        %v954 = vrcp.pop 32.0
        %v955 = vmul.f32 32.0, %v954
        %v956 = vsub.f32 1.0, %v955
        %v957 = vmul.f32 %v954, %v956
        %v958 = vadd.f32 %v954, %v957
        %vm959 = vweird.f32 %v954
        %v960 = vsel %vm959, %v954, %v958
        %v961 = vmul.f32 %v938, %v960
        %v962 = vmul.f32 %v941, %v960
        %v963 = vmul.f32 %v944, %v960
        %v964 = vmul.f32 %v947, %v960
        %v965 = vmul.f32 %v950, %v960
        %v966 = vmul.f32 %v953, %v960
        %v967 = vsub.f32 %v927, %v961
        %v968 = vsub.f32 %v928, %v962
        %v969 = vsub.f32 %v929, %v963
        %v970 = vsub.f32 %v930, %v964
        %v971 = vsub.f32 %v931, %v965
        %v972 = vsub.f32 %v932, %v966
        %v973 = vmul.f32 %v967, %v967
        %v974 = vmul.f32 %v968, %v968
        %v975 = vmul.f32 %v969, %v969
        %v976 = vmul.f32 %v970, %v970
        %v977 = vmul.f32 %v971, %v971
        %v978 = vmul.f32 %v972, %v972
        %v979 = vsel %vm935, %v973, 0.0
        %980 = vadd.xlane.f32.xlu0 %v979
        %v981 = vpop.xlane.xlu0 %980
        %v982 = vsel %vm935, %v974, 0.0
        %983 = vadd.xlane.f32.xlu0 %v982
        %v984 = vpop.xlane.xlu0 %983
        %v985 = vsel %vm935, %v975, 0.0
        %986 = vadd.xlane.f32.xlu0 %v985
        %v987 = vpop.xlane.xlu0 %986
        %v988 = vsel %vm935, %v976, 0.0
        %989 = vadd.xlane.f32.xlu0 %v988
        %v990 = vpop.xlane.xlu0 %989
        %v991 = vsel %vm935, %v977, 0.0
        %992 = vadd.xlane.f32.xlu0 %v991
        %v993 = vpop.xlane.xlu0 %992
        %v994 = vsel %vm935, %v978, 0.0
        %995 = vadd.xlane.f32.xlu0 %v994
        %v996 = vpop.xlane.xlu0 %995
        %v997 = vmul.f32 %v981, %v960
        %v998 = vmul.f32 %v984, %v960
        %v999 = vmul.f32 %v987, %v960
        %v1000 = vmul.f32 %v990, %v960
        %v1001 = vmul.f32 %v993, %v960
        %v1002 = vmul.f32 %v996, %v960
        %v1003 = vadd.f32 %v997, 1e-06
        %v1004 = vadd.f32 %v998, 1e-06
        %v1005 = vadd.f32 %v999, 1e-06
        %v1006 = vadd.f32 %v1000, 1e-06
        %v1007 = vadd.f32 %v1001, 1e-06
        %v1008 = vadd.f32 %v1002, 1e-06
        %v1009 = vrsqrt.pop %v1003
        %v1010 = vmul.f32 %v1009, %v1003
        %v1011 = vmul.f32 %v1010, %v1009
        %v1012 = vmul.f32 0.5, %v1011
        %v1013 = vsub.f32 1.5, %v1012
        %v1014 = vmul.f32 %v1009, %v1013
        %vm1015 = vweird.f32 %v1003
        %vm1016 = vweird.f32 %v1009
        %vm1017 = vmor %vm1015, %vm1016
        %v1018 = vsel %vm1017, %v1009, %v1014
        %v1019 = vrsqrt.pop %v1004
        %v1020 = vmul.f32 %v1019, %v1004
        %v1021 = vmul.f32 %v1020, %v1019
        %v1022 = vmul.f32 0.5, %v1021
        %v1023 = vsub.f32 1.5, %v1022
        %v1024 = vmul.f32 %v1019, %v1023
        %vm1025 = vweird.f32 %v1004
        %vm1026 = vweird.f32 %v1019
        %vm1027 = vmor %vm1025, %vm1026
        %v1028 = vsel %vm1027, %v1019, %v1024
        %v1029 = vrsqrt.pop %v1005
        %v1030 = vmul.f32 %v1029, %v1005
        %v1031 = vmul.f32 %v1030, %v1029
        %v1032 = vmul.f32 0.5, %v1031
        %v1033 = vsub.f32 1.5, %v1032
        %v1034 = vmul.f32 %v1029, %v1033
        %vm1035 = vweird.f32 %v1005
        %vm1036 = vweird.f32 %v1029
        %vm1037 = vmor %vm1035, %vm1036
        %v1038 = vsel %vm1037, %v1029, %v1034
        %v1039 = vrsqrt.pop %v1006
        %v1040 = vmul.f32 %v1039, %v1006
        %v1041 = vmul.f32 %v1040, %v1039
        %v1042 = vmul.f32 0.5, %v1041
        %v1043 = vsub.f32 1.5, %v1042
        %v1044 = vmul.f32 %v1039, %v1043
        %vm1045 = vweird.f32 %v1006
        %vm1046 = vweird.f32 %v1039
        %vm1047 = vmor %vm1045, %vm1046
        %v1048 = vsel %vm1047, %v1039, %v1044
        %v1049 = vrsqrt.pop %v1007
        %v1050 = vmul.f32 %v1049, %v1007
        %v1051 = vmul.f32 %v1050, %v1049
        %v1052 = vmul.f32 0.5, %v1051
        %v1053 = vsub.f32 1.5, %v1052
        %v1054 = vmul.f32 %v1049, %v1053
        %vm1055 = vweird.f32 %v1007
        %vm1056 = vweird.f32 %v1049
        %vm1057 = vmor %vm1055, %vm1056
        %v1058 = vsel %vm1057, %v1049, %v1054
        %v1059 = vrsqrt.pop %v1008
        %v1060 = vmul.f32 %v1059, %v1008
        %v1061 = vmul.f32 %v1060, %v1059
        %v1062 = vmul.f32 0.5, %v1061
        %v1063 = vsub.f32 1.5, %v1062
        %v1064 = vmul.f32 %v1059, %v1063
        %vm1065 = vweird.f32 %v1008
        %vm1066 = vweird.f32 %v1059
        %vm1067 = vmor %vm1065, %vm1066
        %v1068 = vsel %vm1067, %v1059, %v1064
        %v1069 = vmul.f32 %v967, %v1018
        %v1070 = vmul.f32 %v968, %v1028
        %v1071 = vmul.f32 %v969, %v1038
        %v1072 = vmul.f32 %v970, %v1048
        %v1073 = vmul.f32 %v971, %v1058
        %v1074 = vmul.f32 %v972, %v1068
        %v1076 = vperm.slane %v933, 0
        %v1078 = vmul.f32 %v1069, %v1076
        %v1079 = vmul.f32 %v1070, %v1076
        %v1080 = vmul.f32 %v1071, %v1076
        %v1081 = vmul.f32 %v1072, %v1076
        %v1082 = vmul.f32 %v1073, %v1076
        %v1083 = vmul.f32 %v1074, %v1076
        %v1085 = vperm.slane %v934, 0
        %v1087 = vadd.f32 %v1078, %v1085
        %v1088 = vadd.f32 %v1079, %v1085
        %v1089 = vadd.f32 %v1080, %v1085
        %v1090 = vadd.f32 %v1081, %v1085
        %v1091 = vadd.f32 %v1082, %v1085
        %v1092 = vadd.f32 %v1083, %v1085
        %v1093 = vpack.c.bf16 %v1088, %v1087
        %v1094 = vpack.c.bf16 %v1090, %v1089
        %v1095 = vpack.c.bf16 %v1092, %v1091
        %v1096 = vld [vmem:[%s781] sm:$0xf]
        %v1097 = vld [vmem:[%s781 + $0x4] sm:$0xf]
        %v1098 = vld [vmem:[%s781 + $0x8] sm:$0xf]
        %v1099 = vld [vmem:[%s781 + $0xc] sm:$0xf]
        %v1100 = vld [vmem:[%s784] sm:$0x1]
        %v1102 = vperm.slane %v1100, 0
        %v1108 = vunpack.c.l.b16 %v1096
        %v1109 = vunpack.c.l.b16 %v1097
        %v1110 = vunpack.c.l.b16 %v1098
        %v1111 = vunpack.c.l.b16 %v1099
        %v1112 = vpack.c.b16 %v1109, %v1108
        %v1113 = vpack.c.b16 %v1111, %v1110
        %v1117 = vsel %vm935, %v1093, 0
        %v1120 = vsel %vm935, %v1094, 0
        %v1123 = vsel %vm935, %v1095, 0
        %1125 = vmatpush.bf16.msra.mxu0 0
        %1126 = vmatpush.bf16.msra.mxu0 0
        %1127 = vmatpush.bf16.msra.mxu0 0
        %1128 = vmatpush.bf16.msra.mxu0 0
        %1129 = vmatpush.bf16.msra.mxu0 0
        %1130 = vmatpush.bf16.msra.mxu0 0
        %1131 = vmatpush.bf16.msra.mxu0 %v1113
        %1132 = vmatpush.bf16.msra.mxu0 %v1112
        %1133 = vmatmul.bf16.gmra.mxu0 %v1117
        %v1134 = vpop.f32.mrf.mxu0
        %v1135 = vadd.f32 %v1102, %v1134
        %v1136 = vpop.f32.mrf.mxu0
        %v1137 = vadd.f32 %v1102, %v1136
        %1138 = vmatmul.bf16.gmra.mxu0 %v1120
        %v1139 = vpop.f32.mrf.mxu0
        %v1140 = vadd.f32 %v1102, %v1139
        %v1141 = vpop.f32.mrf.mxu0
        %v1142 = vadd.f32 %v1102, %v1141
        %1143 = vmatmul.bf16.gmra.mxu0 %v1123
        %v1144 = vpop.f32.mrf.mxu0
        %v1145 = vadd.f32 %v1102, %v1144
        %v1146 = vpop.f32.mrf.mxu0
        %v1147 = vadd.f32 %v1102, %v1146
        %1148 = vdwg.mxu0
        %v1149 = vpack.c.bf16 %v1137, %v1135
        %v1150 = vpack.c.bf16 %v1140, %v1140
        %1153 = vrot.lane.b32.xlu0 %v1149, 96
        %v1154 = vpop.permute.xlu0 %1153
        %1155 = vrot.lane.b32.xlu0 %v1150, 96
        %v1156 = vpop.permute.xlu0 %1155
        %vm1157 = vcmask 130048
        %v1159 = vsel %vm1157, %v1149, 0
        %v1162 = vsel %vm1157, %v1150, 0
        %v1165 = vsel %vm1157, %v1154, 0
        %v1168 = vsel %vm1157, %v1156, 0
        %1170 = vmatpush.bf16.xpose.msra.mxu0 0
        %1171 = vmatpush.bf16.xpose.msra.mxu0 0
        %1172 = vmatpush.bf16.xpose.msra.mxu0 0
        %1173 = vmatpush.bf16.xpose.msra.mxu0 0
        %1174 = vmatpush.bf16.xpose.msra.mxu0 0
        %1175 = vmatpush.bf16.xpose.msra.mxu0 0
        %1176 = vmatpush.bf16.xpose.msra.mxu0 %v1168
        %1177 = vmatpush.bf16.xpose.msra.mxu0 %v1165
        %1178 = vmatmul.bf16.gmra.mxu0 %v1159
        %v1179 = vpop.f32.mrf.mxu0
        %v1180 = vadd.f32 %v926, %v1179
        %v1181 = vpop.f32.mrf.mxu0
        %v1182 = vadd.f32 %v926, %v1181
        %1183 = vmatmul.bf16.gmra.mxu0 %v1162
        %v1184 = vpop.f32.mrf.mxu0
        %v1185 = vadd.f32 %v926, %v1184
        %v1186 = vpop.f32.mrf.mxu0
        %1187 = vdwg.mxu0
        %vm1188 = vcmask 195584
        %v1189 = vsel %vm1188, %v1180, -inf
        %1190 = vmax.xlane.f32.xlu0 %v1189
        %v1191 = vpop.xlane.xlu0 %1190
        %v1192 = vsel %vm1188, %v1182, -inf
        %1193 = vmax.xlane.f32.xlu0 %v1192
        %v1194 = vpop.xlane.xlu0 %1193
        %v1195 = vsel %vm1188, %v1185, -inf
        %1196 = vmax.xlane.f32.xlu0 %v1195
        %v1197 = vpop.xlane.xlu0 %1196
        %v1198 = vsub.f32 %v1180, %v1191
        %v1199 = vsub.f32 %v1182, %v1194
        %v1200 = vsub.f32 %v1185, %v1197
        %v1201 = vmul.f32 %v1198, 1.442695
        %v1202 = vpow.pop %v1201
        %v1203 = vmul.f32 %v1199, 1.442695
        %v1204 = vpow.pop %v1203
        %v1205 = vmul.f32 %v1200, 1.442695
        %v1206 = vpow.pop %v1205
        %v1207 = vsel %vm1188, %v1202, 0.0
        %1208 = vadd.xlane.f32.xlu0 %v1207
        %v1209 = vpop.xlane.xlu0 %1208
        %v1210 = vsel %vm1188, %v1204, 0.0
        %1211 = vadd.xlane.f32.xlu0 %v1210
        %v1212 = vpop.xlane.xlu0 %1211
        %v1213 = vsel %vm1188, %v1206, 0.0
        %1214 = vadd.xlane.f32.xlu0 %v1213
        %v1215 = vpop.xlane.xlu0 %1214
        %v1216 = vrcp.pop %v1209
        %v1217 = vrcp.pop %v1212
        %v1218 = vrcp.pop %v1215
        %v1219 = vpack.c.bf16 %v1204, %v1202
        %v1220 = vpack.c.bf16 %v1206, %v1206
        %1221 = vrot.lane.b32.xlu0 %v1149, 64
        %v1222 = vpop.permute.xlu0 %1221
        %1223 = vrot.lane.b32.xlu0 %v1150, 64
        %v1224 = vpop.permute.xlu0 %1223
        %v1227 = vsel %vm1188, %v1219, 0
        %v1230 = vsel %vm1188, %v1220, 0
        %vm1232 = vcmask 1043456
        %v1234 = vsel %vm1232, %v1224, 0
        %1236 = vmatpush.bf16.msra.mxu0 0
        %1237 = vmatpush.bf16.msra.mxu0 0
        %1238 = vmatpush.bf16.msra.mxu0 0
        %1239 = vmatpush.bf16.msra.mxu0 0
        %1240 = vmatpush.bf16.msra.mxu0 0
        %1241 = vmatpush.bf16.msra.mxu0 0
        %1242 = vmatpush.bf16.msra.mxu0 %v1234
        %1243 = vmatpush.bf16.msra.mxu0 %v1222
        %1244 = vmatmul.bf16.gmra.mxu0 %v1227
        %v1245 = vpop.f32.mrf.mxu0
        %v1246 = vadd.f32 0.0, %v1245
        %v1247 = vpop.f32.mrf.mxu0
        %v1248 = vadd.f32 0.0, %v1247
        %1249 = vmatmul.bf16.gmra.mxu0 %v1230
        %v1250 = vpop.f32.mrf.mxu0
        %v1251 = vadd.f32 0.0, %v1250
        %v1252 = vpop.f32.mrf.mxu0
        %1253 = vdwg.mxu0
        %v1254 = vmul.f32 %v1246, %v1216
        %v1255 = vmul.f32 %v1248, %v1217
        %v1256 = vmul.f32 %v1251, %v1218
        %1257 = vrot.lane.b32.xlu0 %v1149, 112
        %v1258 = vpop.permute.xlu0 %1257
        %1259 = vrot.lane.b32.xlu0 %v1150, 112
        %v1260 = vpop.permute.xlu0 %1259
        %1261 = vrot.lane.b32.xlu0 %v1149, 80
        %v1262 = vpop.permute.xlu0 %1261
        %1263 = vrot.lane.b32.xlu0 %v1150, 80
        %v1264 = vpop.permute.xlu0 %1263
        %v1266 = vsel %vm1157, %v1258, 0
        %v1269 = vsel %vm1157, %v1260, 0
        %v1272 = vsel %vm1157, %v1262, 0
        %v1275 = vsel %vm1157, %v1264, 0
        %1277 = vmatpush.bf16.xpose.msra.mxu0 0
        %1278 = vmatpush.bf16.xpose.msra.mxu0 0
        %1279 = vmatpush.bf16.xpose.msra.mxu0 0
        %1280 = vmatpush.bf16.xpose.msra.mxu0 0
        %1281 = vmatpush.bf16.xpose.msra.mxu0 0
        %1282 = vmatpush.bf16.xpose.msra.mxu0 0
        %1283 = vmatpush.bf16.xpose.msra.mxu0 %v1275
        %1284 = vmatpush.bf16.xpose.msra.mxu0 %v1272
        %1285 = vmatmul.bf16.gmra.mxu0 %v1266
        %v1286 = vpop.f32.mrf.mxu0
        %v1287 = vadd.f32 %v926, %v1286
        %v1288 = vpop.f32.mrf.mxu0
        %v1289 = vadd.f32 %v926, %v1288
        %1290 = vmatmul.bf16.gmra.mxu0 %v1269
        %v1291 = vpop.f32.mrf.mxu0
        %v1292 = vadd.f32 %v926, %v1291
        %v1293 = vpop.f32.mrf.mxu0
        %1294 = vdwg.mxu0
        %v1295 = vsel %vm1188, %v1287, -inf
        %1296 = vmax.xlane.f32.xlu0 %v1295
        %v1297 = vpop.xlane.xlu0 %1296
        %v1298 = vsel %vm1188, %v1289, -inf
        %1299 = vmax.xlane.f32.xlu0 %v1298
        %v1300 = vpop.xlane.xlu0 %1299
        %v1301 = vsel %vm1188, %v1292, -inf
        %1302 = vmax.xlane.f32.xlu0 %v1301
        %v1303 = vpop.xlane.xlu0 %1302
        %v1304 = vsub.f32 %v1287, %v1297
        %v1305 = vsub.f32 %v1289, %v1300
        %v1306 = vsub.f32 %v1292, %v1303
        %v1307 = vmul.f32 %v1304, 1.442695
        %v1308 = vpow.pop %v1307
        %v1309 = vmul.f32 %v1305, 1.442695
        %v1310 = vpow.pop %v1309
        %v1311 = vmul.f32 %v1306, 1.442695
        %v1312 = vpow.pop %v1311
        %v1313 = vsel %vm1188, %v1308, 0.0
        %1314 = vadd.xlane.f32.xlu0 %v1313
        %v1315 = vpop.xlane.xlu0 %1314
        %v1316 = vsel %vm1188, %v1310, 0.0
        %1317 = vadd.xlane.f32.xlu0 %v1316
        %v1318 = vpop.xlane.xlu0 %1317
        %v1319 = vsel %vm1188, %v1312, 0.0
        %1320 = vadd.xlane.f32.xlu0 %v1319
        %v1321 = vpop.xlane.xlu0 %1320
        %v1322 = vrcp.pop %v1315
        %v1323 = vrcp.pop %v1318
        %v1324 = vrcp.pop %v1321
        %v1325 = vpack.c.bf16 %v1310, %v1308
        %v1326 = vpack.c.bf16 %v1312, %v1312
        %1327 = vrot.lane.b32.xlu0 %v1149, 48
        %v1328 = vpop.permute.xlu0 %1327
        %1329 = vrot.lane.b32.xlu0 %v1150, 48
        %v1330 = vpop.permute.xlu0 %1329
        %v1333 = vsel %vm1188, %v1325, 0
        %v1336 = vsel %vm1188, %v1326, 0
        %v1339 = vsel %vm1232, %v1330, 0
        %1341 = vmatpush.bf16.msra.mxu0 0
        %1342 = vmatpush.bf16.msra.mxu0 0
        %1343 = vmatpush.bf16.msra.mxu0 0
        %1344 = vmatpush.bf16.msra.mxu0 0
        %1345 = vmatpush.bf16.msra.mxu0 0
        %1346 = vmatpush.bf16.msra.mxu0 0
        %1347 = vmatpush.bf16.msra.mxu0 %v1339
        %1348 = vmatpush.bf16.msra.mxu0 %v1328
        %1349 = vmatmul.bf16.gmra.mxu0 %v1333
        %v1350 = vpop.f32.mrf.mxu0
        %v1351 = vadd.f32 0.0, %v1350
        %v1352 = vpop.f32.mrf.mxu0
        %v1353 = vadd.f32 0.0, %v1352
        %1354 = vmatmul.bf16.gmra.mxu0 %v1336
        %v1355 = vpop.f32.mrf.mxu0
        %v1356 = vadd.f32 0.0, %v1355
        %v1357 = vpop.f32.mrf.mxu0
        %1358 = vdwg.mxu0
        %v1359 = vmul.f32 %v1351, %v1322
        %v1360 = vmul.f32 %v1353, %v1323
        %v1361 = vmul.f32 %v1356, %v1324
        %1365 = vrot.lane.b32.xlu0 %v1359, 16
        %v1366 = vpop.permute.xlu0 %1365
        %1367 = vrot.lane.b32.xlu0 %v1360, 16
        %v1368 = vpop.permute.xlu0 %1367
        %1369 = vrot.lane.b32.xlu0 %v1361, 16
        %v1370 = vpop.permute.xlu0 %1369
        %v1374 = vsel %vm1157, %v1254, %v1366
        %v1375 = vsel %vm1157, %v1255, %v1368
        %v1376 = vsel %vm1157, %v1256, %v1370
        %1377 = vst.msk [vmem:[#allocation3] sm:$0xff] %vm935, %v1374
        %1378 = vst.msk [vmem:[#allocation3 + $0x8] sm:$0xff] %vm935, %v1375
        %1379 = vst.msk [vmem:[#allocation3 + $0x10] sm:$0xff] %vm935, %v1376
        %v1380 = vpack.c.bf16 %v1145, %v1142
        %v1381 = vpack.c.bf16 %v1147, %v1147
        %1384 = vrot.lane.b32.xlu0 %v1380, 96
        %v1385 = vpop.permute.xlu0 %1384
        %1386 = vrot.lane.b32.xlu0 %v1381, 96
        %v1387 = vpop.permute.xlu0 %1386
        %v1389 = vsel %vm1157, %v1380, 0
        %v1392 = vsel %vm1157, %v1381, 0
        %v1395 = vsel %vm1157, %v1385, 0
        %v1398 = vsel %vm1157, %v1387, 0
        %1400 = vmatpush.bf16.xpose.msra.mxu0 0
        %1401 = vmatpush.bf16.xpose.msra.mxu0 0
        %1402 = vmatpush.bf16.xpose.msra.mxu0 0
        %1403 = vmatpush.bf16.xpose.msra.mxu0 0
        %1404 = vmatpush.bf16.xpose.msra.mxu0 0
        %1405 = vmatpush.bf16.xpose.msra.mxu0 0
        %1406 = vmatpush.bf16.xpose.msra.mxu0 %v1398
        %1407 = vmatpush.bf16.xpose.msra.mxu0 %v1395
        %1408 = vmatmul.bf16.gmra.mxu0 %v1389
        %v1409 = vpop.f32.mrf.mxu0
        %v1410 = vadd.f32 %v926, %v1409
        %v1411 = vpop.f32.mrf.mxu0
        %v1412 = vadd.f32 %v926, %v1411
        %1413 = vmatmul.bf16.gmra.mxu0 %v1392
        %v1414 = vpop.f32.mrf.mxu0
        %v1415 = vadd.f32 %v926, %v1414
        %v1416 = vpop.f32.mrf.mxu0
        %1417 = vdwg.mxu0
        %v1418 = vsel %vm1188, %v1410, -inf
        %1419 = vmax.xlane.f32.xlu0 %v1418
        %v1420 = vpop.xlane.xlu0 %1419
        %v1421 = vsel %vm1188, %v1412, -inf
        %1422 = vmax.xlane.f32.xlu0 %v1421
        %v1423 = vpop.xlane.xlu0 %1422
        %v1424 = vsel %vm1188, %v1415, -inf
        %1425 = vmax.xlane.f32.xlu0 %v1424
        %v1426 = vpop.xlane.xlu0 %1425
        %v1427 = vsub.f32 %v1410, %v1420
        %v1428 = vsub.f32 %v1412, %v1423
        %v1429 = vsub.f32 %v1415, %v1426
        %v1430 = vmul.f32 %v1427, 1.442695
        %v1431 = vpow.pop %v1430
        %v1432 = vmul.f32 %v1428, 1.442695
        %v1433 = vpow.pop %v1432
        %v1434 = vmul.f32 %v1429, 1.442695
        %v1435 = vpow.pop %v1434
        %v1436 = vsel %vm1188, %v1431, 0.0
        %1437 = vadd.xlane.f32.xlu0 %v1436
        %v1438 = vpop.xlane.xlu0 %1437
        %v1439 = vsel %vm1188, %v1433, 0.0
        %1440 = vadd.xlane.f32.xlu0 %v1439
        %v1441 = vpop.xlane.xlu0 %1440
        %v1442 = vsel %vm1188, %v1435, 0.0
        %1443 = vadd.xlane.f32.xlu0 %v1442
        %v1444 = vpop.xlane.xlu0 %1443
        %v1445 = vrcp.pop %v1438
        %v1446 = vrcp.pop %v1441
        %v1447 = vrcp.pop %v1444
        %v1448 = vpack.c.bf16 %v1433, %v1431
        %v1449 = vpack.c.bf16 %v1435, %v1435
        %1450 = vrot.lane.b32.xlu0 %v1380, 64
        %v1451 = vpop.permute.xlu0 %1450
        %1452 = vrot.lane.b32.xlu0 %v1381, 64
        %v1453 = vpop.permute.xlu0 %1452
        %v1456 = vsel %vm1188, %v1448, 0
        %v1459 = vsel %vm1188, %v1449, 0
        %v1462 = vsel %vm1232, %v1453, 0
        %1464 = vmatpush.bf16.msra.mxu0 0
        %1465 = vmatpush.bf16.msra.mxu0 0
        %1466 = vmatpush.bf16.msra.mxu0 0
        %1467 = vmatpush.bf16.msra.mxu0 0
        %1468 = vmatpush.bf16.msra.mxu0 0
        %1469 = vmatpush.bf16.msra.mxu0 0
        %1470 = vmatpush.bf16.msra.mxu0 %v1462
        %1471 = vmatpush.bf16.msra.mxu0 %v1451
        %1472 = vmatmul.bf16.gmra.mxu0 %v1456
        %v1473 = vpop.f32.mrf.mxu0
        %v1474 = vadd.f32 0.0, %v1473
        %v1475 = vpop.f32.mrf.mxu0
        %v1476 = vadd.f32 0.0, %v1475
        %1477 = vmatmul.bf16.gmra.mxu0 %v1459
        %v1478 = vpop.f32.mrf.mxu0
        %v1479 = vadd.f32 0.0, %v1478
        %v1480 = vpop.f32.mrf.mxu0
        %1481 = vdwg.mxu0
        %v1482 = vmul.f32 %v1474, %v1445
        %v1483 = vmul.f32 %v1476, %v1446
        %v1484 = vmul.f32 %v1479, %v1447
        %1485 = vrot.lane.b32.xlu0 %v1380, 112
        %v1486 = vpop.permute.xlu0 %1485
        %1487 = vrot.lane.b32.xlu0 %v1381, 112
        %v1488 = vpop.permute.xlu0 %1487
        %1489 = vrot.lane.b32.xlu0 %v1380, 80
        %v1490 = vpop.permute.xlu0 %1489
        %1491 = vrot.lane.b32.xlu0 %v1381, 80
        %v1492 = vpop.permute.xlu0 %1491
        %v1494 = vsel %vm1157, %v1486, 0
        %v1497 = vsel %vm1157, %v1488, 0
        %v1500 = vsel %vm1157, %v1490, 0
        %v1503 = vsel %vm1157, %v1492, 0
        %1505 = vmatpush.bf16.xpose.msra.mxu0 0
        %1506 = vmatpush.bf16.xpose.msra.mxu0 0
        %1507 = vmatpush.bf16.xpose.msra.mxu0 0
        %1508 = vmatpush.bf16.xpose.msra.mxu0 0
        %1509 = vmatpush.bf16.xpose.msra.mxu0 0
        %1510 = vmatpush.bf16.xpose.msra.mxu0 0
        %1511 = vmatpush.bf16.xpose.msra.mxu0 %v1503
        %1512 = vmatpush.bf16.xpose.msra.mxu0 %v1500
        %1513 = vmatmul.bf16.gmra.mxu0 %v1494
        %v1514 = vpop.f32.mrf.mxu0
        %v1515 = vadd.f32 %v926, %v1514
        %v1516 = vpop.f32.mrf.mxu0
        %v1517 = vadd.f32 %v926, %v1516
        %1518 = vmatmul.bf16.gmra.mxu0 %v1497
        %v1519 = vpop.f32.mrf.mxu0
        %v1520 = vadd.f32 %v926, %v1519
        %v1521 = vpop.f32.mrf.mxu0
        %1522 = vdwg.mxu0
        %v1523 = vsel %vm1188, %v1515, -inf
        %1524 = vmax.xlane.f32.xlu0 %v1523
        %v1525 = vpop.xlane.xlu0 %1524
        %v1526 = vsel %vm1188, %v1517, -inf
        %1527 = vmax.xlane.f32.xlu0 %v1526
        %v1528 = vpop.xlane.xlu0 %1527
        %v1529 = vsel %vm1188, %v1520, -inf
        %1530 = vmax.xlane.f32.xlu0 %v1529
        %v1531 = vpop.xlane.xlu0 %1530
        %v1532 = vsub.f32 %v1515, %v1525
        %v1533 = vsub.f32 %v1517, %v1528
        %v1534 = vsub.f32 %v1520, %v1531
        %v1535 = vmul.f32 %v1532, 1.442695
        %v1536 = vpow.pop %v1535
        %v1537 = vmul.f32 %v1533, 1.442695
        %v1538 = vpow.pop %v1537
        %v1539 = vmul.f32 %v1534, 1.442695
        %v1540 = vpow.pop %v1539
        %v1541 = vsel %vm1188, %v1536, 0.0
        %1542 = vadd.xlane.f32.xlu0 %v1541
        %v1543 = vpop.xlane.xlu0 %1542
        %v1544 = vsel %vm1188, %v1538, 0.0
        %1545 = vadd.xlane.f32.xlu0 %v1544
        %v1546 = vpop.xlane.xlu0 %1545
        %v1547 = vsel %vm1188, %v1540, 0.0
        %1548 = vadd.xlane.f32.xlu0 %v1547
        %v1549 = vpop.xlane.xlu0 %1548
        %v1550 = vrcp.pop %v1543
        %v1551 = vrcp.pop %v1546
        %v1552 = vrcp.pop %v1549
        %v1553 = vpack.c.bf16 %v1538, %v1536
        %v1554 = vpack.c.bf16 %v1540, %v1540
        %1555 = vrot.lane.b32.xlu0 %v1380, 48
        %v1556 = vpop.permute.xlu0 %1555
        %1557 = vrot.lane.b32.xlu0 %v1381, 48
        %v1558 = vpop.permute.xlu0 %1557
        %v1561 = vsel %vm1188, %v1553, 0
        %v1564 = vsel %vm1188, %v1554, 0
        %v1567 = vsel %vm1232, %v1558, 0
        %1569 = vmatpush.bf16.msra.mxu0 0
        %1570 = vmatpush.bf16.msra.mxu0 0
        %1571 = vmatpush.bf16.msra.mxu0 0
        %1572 = vmatpush.bf16.msra.mxu0 0
        %1573 = vmatpush.bf16.msra.mxu0 0
        %1574 = vmatpush.bf16.msra.mxu0 0
        %1575 = vmatpush.bf16.msra.mxu0 %v1567
        %1576 = vmatpush.bf16.msra.mxu0 %v1556
        %1577 = vmatmul.bf16.gmra.mxu0 %v1561
        %v1578 = vpop.f32.mrf.mxu0
        %v1579 = vadd.f32 0.0, %v1578
        %v1580 = vpop.f32.mrf.mxu0
        %v1581 = vadd.f32 0.0, %v1580
        %1582 = vmatmul.bf16.gmra.mxu0 %v1564
        %v1583 = vpop.f32.mrf.mxu0
        %v1584 = vadd.f32 0.0, %v1583
        %v1585 = vpop.f32.mrf.mxu0
        %1586 = vdwg.mxu0
        %v1587 = vmul.f32 %v1579, %v1550
        %v1588 = vmul.f32 %v1581, %v1551
        %v1589 = vmul.f32 %v1584, %v1552
        %1593 = vrot.lane.b32.xlu0 %v1587, 16
        %v1594 = vpop.permute.xlu0 %1593
        %1595 = vrot.lane.b32.xlu0 %v1588, 16
        %v1596 = vpop.permute.xlu0 %1595
        %1597 = vrot.lane.b32.xlu0 %v1589, 16
        %v1598 = vpop.permute.xlu0 %1597
        %v1602 = vsel %vm1157, %v1482, %v1594
        %v1603 = vsel %vm1157, %v1483, %v1596
        %v1604 = vsel %vm1157, %v1484, %v1598
        %1605 = vst.msk [vmem:[#allocation3 + $0x18] sm:$0xff] %vm935, %v1602
        %1606 = vst.msk [vmem:[#allocation3 + $0x20] sm:$0xff] %vm935, %v1603
        %1607 = vst.msk [vmem:[#allocation3 + $0x28] sm:$0xff] %vm935, %v1604
        %v1608 = vld [vmem:[#allocation3] sm:$0xff]
        %v1609 = vld [vmem:[#allocation3 + $0x8] sm:$0xff]
        %v1610 = vld [vmem:[#allocation3 + $0x10] sm:$0xff]
        %v1611 = vld [vmem:[#allocation3 + $0x18] sm:$0xff]
        %v1612 = vld [vmem:[#allocation3 + $0x20] sm:$0xff]
        %v1613 = vld [vmem:[#allocation3 + $0x28] sm:$0xff]
        %v1614 = vpack.c.bf16 %v1609, %v1608
        %v1615 = vpack.c.bf16 %v1611, %v1610
        %v1616 = vpack.c.bf16 %v1613, %v1612
        %v1617 = vld [vmem:[%s789] sm:$0xf]
        %v1618 = vld [vmem:[%s789 + $0x4] sm:$0xf]
        %v1619 = vld [vmem:[%s789 + $0x8] sm:$0xf]
        %v1620 = vld [vmem:[%s789 + $0xc] sm:$0xf]
        %v1625 = vunpack.c.l.b16 %v1617
        %v1626 = vunpack.c.l.b16 %v1618
        %v1627 = vunpack.c.l.b16 %v1619
        %v1628 = vunpack.c.l.b16 %v1620
        %v1629 = vpack.c.b16 %v1626, %v1625
        %v1630 = vpack.c.b16 %v1628, %v1627
        %v1634 = vsel %vm935, %v1614, 0
        %v1637 = vsel %vm935, %v1615, 0
        %v1640 = vsel %vm935, %v1616, 0
        %1642 = vmatpush.bf16.msra.mxu0 0
        %1643 = vmatpush.bf16.msra.mxu0 0
        %1644 = vmatpush.bf16.msra.mxu0 0
        %1645 = vmatpush.bf16.msra.mxu0 0
        %1646 = vmatpush.bf16.msra.mxu0 0
        %1647 = vmatpush.bf16.msra.mxu0 0
        %1648 = vmatpush.bf16.msra.mxu0 %v1630
        %1649 = vmatpush.bf16.msra.mxu0 %v1629
        %1650 = vmatmul.bf16.gmra.mxu0 %v1634
        %v1651 = vpop.f32.mrf.mxu0
        %v1652 = vadd.f32 0.0, %v1651
        %v1653 = vpop.f32.mrf.mxu0
        %v1654 = vadd.f32 0.0, %v1653
        %1655 = vmatmul.bf16.gmra.mxu0 %v1637
        %v1656 = vpop.f32.mrf.mxu0
        %v1657 = vadd.f32 0.0, %v1656
        %v1658 = vpop.f32.mrf.mxu0
        %v1659 = vadd.f32 0.0, %v1658
        %1660 = vmatmul.bf16.gmra.mxu0 %v1640
        %v1661 = vpop.f32.mrf.mxu0
        %v1662 = vadd.f32 0.0, %v1661
        %v1663 = vpop.f32.mrf.mxu0
        %v1664 = vadd.f32 0.0, %v1663
        %1665 = vdwg.mxu0
        %v1666 = vadd.f32 %v927, %v1652
        %v1667 = vadd.f32 %v928, %v1654
        %v1668 = vadd.f32 %v929, %v1657
        %v1669 = vadd.f32 %v930, %v1659
        %v1670 = vadd.f32 %v931, %v1662
        %v1671 = vadd.f32 %v932, %v1664
        %v1672 = vld [vmem:[%s792] sm:$0x1]
        %v1674 = vperm.slane %v1672, 0
        %v1676 = vadd.f32 %v1666, %v1674
        %v1677 = vadd.f32 %v1667, %v1674
        %v1678 = vadd.f32 %v1668, %v1674
        %v1679 = vadd.f32 %v1669, %v1674
        %v1680 = vadd.f32 %v1670, %v1674
        %v1681 = vadd.f32 %v1671, %v1674
        %v1682 = vld [vmem:[%s795] sm:$0x1]
        %v1683 = vld [vmem:[%s798] sm:$0x1]
        %v1684 = vsel %vm935, %v1676, 0.0
        %1685 = vadd.xlane.f32.xlu0 %v1684
        %v1686 = vpop.xlane.xlu0 %1685
        %v1687 = vsel %vm935, %v1677, 0.0
        %1688 = vadd.xlane.f32.xlu0 %v1687
        %v1689 = vpop.xlane.xlu0 %1688
        %v1690 = vsel %vm935, %v1678, 0.0
        %1691 = vadd.xlane.f32.xlu0 %v1690
        %v1692 = vpop.xlane.xlu0 %1691
        %v1693 = vsel %vm935, %v1679, 0.0
        %1694 = vadd.xlane.f32.xlu0 %v1693
        %v1695 = vpop.xlane.xlu0 %1694
        %v1696 = vsel %vm935, %v1680, 0.0
        %1697 = vadd.xlane.f32.xlu0 %v1696
        %v1698 = vpop.xlane.xlu0 %1697
        %v1699 = vsel %vm935, %v1681, 0.0
        %1700 = vadd.xlane.f32.xlu0 %v1699
        %v1701 = vpop.xlane.xlu0 %1700
        %v1702 = vmul.f32 %v1686, %v960
        %v1703 = vmul.f32 %v1689, %v960
        %v1704 = vmul.f32 %v1692, %v960
        %v1705 = vmul.f32 %v1695, %v960
        %v1706 = vmul.f32 %v1698, %v960
        %v1707 = vmul.f32 %v1701, %v960
        %v1708 = vsub.f32 %v1676, %v1702
        %v1709 = vsub.f32 %v1677, %v1703
        %v1710 = vsub.f32 %v1678, %v1704
        %v1711 = vsub.f32 %v1679, %v1705
        %v1712 = vsub.f32 %v1680, %v1706
        %v1713 = vsub.f32 %v1681, %v1707
        %v1714 = vmul.f32 %v1708, %v1708
        %v1715 = vmul.f32 %v1709, %v1709
        %v1716 = vmul.f32 %v1710, %v1710
        %v1717 = vmul.f32 %v1711, %v1711
        %v1718 = vmul.f32 %v1712, %v1712
        %v1719 = vmul.f32 %v1713, %v1713
        %v1720 = vsel %vm935, %v1714, 0.0
        %1721 = vadd.xlane.f32.xlu0 %v1720
        %v1722 = vpop.xlane.xlu0 %1721
        %v1723 = vsel %vm935, %v1715, 0.0
        %1724 = vadd.xlane.f32.xlu0 %v1723
        %v1725 = vpop.xlane.xlu0 %1724
        %v1726 = vsel %vm935, %v1716, 0.0
        %1727 = vadd.xlane.f32.xlu0 %v1726
        %v1728 = vpop.xlane.xlu0 %1727
        %v1729 = vsel %vm935, %v1717, 0.0
        %1730 = vadd.xlane.f32.xlu0 %v1729
        %v1731 = vpop.xlane.xlu0 %1730
        %v1732 = vsel %vm935, %v1718, 0.0
        %1733 = vadd.xlane.f32.xlu0 %v1732
        %v1734 = vpop.xlane.xlu0 %1733
        %v1735 = vsel %vm935, %v1719, 0.0
        %1736 = vadd.xlane.f32.xlu0 %v1735
        %v1737 = vpop.xlane.xlu0 %1736
        %v1738 = vmul.f32 %v1722, %v960
        %v1739 = vmul.f32 %v1725, %v960
        %v1740 = vmul.f32 %v1728, %v960
        %v1741 = vmul.f32 %v1731, %v960
        %v1742 = vmul.f32 %v1734, %v960
        %v1743 = vmul.f32 %v1737, %v960
        %v1744 = vadd.f32 %v1738, 1e-06
        %v1745 = vadd.f32 %v1739, 1e-06
        %v1746 = vadd.f32 %v1740, 1e-06
        %v1747 = vadd.f32 %v1741, 1e-06
        %v1748 = vadd.f32 %v1742, 1e-06
        %v1749 = vadd.f32 %v1743, 1e-06
        %v1750 = vrsqrt.pop %v1744
        %v1751 = vmul.f32 %v1750, %v1744
        %v1752 = vmul.f32 %v1751, %v1750
        %v1753 = vmul.f32 0.5, %v1752
        %v1754 = vsub.f32 1.5, %v1753
        %v1755 = vmul.f32 %v1750, %v1754
        %vm1756 = vweird.f32 %v1744
        %vm1757 = vweird.f32 %v1750
        %vm1758 = vmor %vm1756, %vm1757
        %v1759 = vsel %vm1758, %v1750, %v1755
        %v1760 = vrsqrt.pop %v1745
        %v1761 = vmul.f32 %v1760, %v1745
        %v1762 = vmul.f32 %v1761, %v1760
        %v1763 = vmul.f32 0.5, %v1762
        %v1764 = vsub.f32 1.5, %v1763
        %v1765 = vmul.f32 %v1760, %v1764
        %vm1766 = vweird.f32 %v1745
        %vm1767 = vweird.f32 %v1760
        %vm1768 = vmor %vm1766, %vm1767
        %v1769 = vsel %vm1768, %v1760, %v1765
        %v1770 = vrsqrt.pop %v1746
        %v1771 = vmul.f32 %v1770, %v1746
        %v1772 = vmul.f32 %v1771, %v1770
        %v1773 = vmul.f32 0.5, %v1772
        %v1774 = vsub.f32 1.5, %v1773
        %v1775 = vmul.f32 %v1770, %v1774
        %vm1776 = vweird.f32 %v1746
        %vm1777 = vweird.f32 %v1770
        %vm1778 = vmor %vm1776, %vm1777
        %v1779 = vsel %vm1778, %v1770, %v1775
        %v1780 = vrsqrt.pop %v1747
        %v1781 = vmul.f32 %v1780, %v1747
        %v1782 = vmul.f32 %v1781, %v1780
        %v1783 = vmul.f32 0.5, %v1782
        %v1784 = vsub.f32 1.5, %v1783
        %v1785 = vmul.f32 %v1780, %v1784
        %vm1786 = vweird.f32 %v1747
        %vm1787 = vweird.f32 %v1780
        %vm1788 = vmor %vm1786, %vm1787
        %v1789 = vsel %vm1788, %v1780, %v1785
        %v1790 = vrsqrt.pop %v1748
        %v1791 = vmul.f32 %v1790, %v1748
        %v1792 = vmul.f32 %v1791, %v1790
        %v1793 = vmul.f32 0.5, %v1792
        %v1794 = vsub.f32 1.5, %v1793
        %v1795 = vmul.f32 %v1790, %v1794
        %vm1796 = vweird.f32 %v1748
        %vm1797 = vweird.f32 %v1790
        %vm1798 = vmor %vm1796, %vm1797
        %v1799 = vsel %vm1798, %v1790, %v1795
        %v1800 = vrsqrt.pop %v1749
        %v1801 = vmul.f32 %v1800, %v1749
        %v1802 = vmul.f32 %v1801, %v1800
        %v1803 = vmul.f32 0.5, %v1802
        %v1804 = vsub.f32 1.5, %v1803
        %v1805 = vmul.f32 %v1800, %v1804
        %vm1806 = vweird.f32 %v1749
        %vm1807 = vweird.f32 %v1800
        %vm1808 = vmor %vm1806, %vm1807
        %v1809 = vsel %vm1808, %v1800, %v1805
        %v1810 = vmul.f32 %v1708, %v1759
        %v1811 = vmul.f32 %v1709, %v1769
        %v1812 = vmul.f32 %v1710, %v1779
        %v1813 = vmul.f32 %v1711, %v1789
        %v1814 = vmul.f32 %v1712, %v1799
        %v1815 = vmul.f32 %v1713, %v1809
        %v1817 = vperm.slane %v1682, 0
        %v1819 = vmul.f32 %v1810, %v1817
        %v1820 = vmul.f32 %v1811, %v1817
        %v1821 = vmul.f32 %v1812, %v1817
        %v1822 = vmul.f32 %v1813, %v1817
        %v1823 = vmul.f32 %v1814, %v1817
        %v1824 = vmul.f32 %v1815, %v1817
        %v1826 = vperm.slane %v1683, 0
        %v1828 = vadd.f32 %v1819, %v1826
        %v1829 = vadd.f32 %v1820, %v1826
        %v1830 = vadd.f32 %v1821, %v1826
        %v1831 = vadd.f32 %v1822, %v1826
        %v1832 = vadd.f32 %v1823, %v1826
        %v1833 = vadd.f32 %v1824, %v1826
        %v1834 = vpack.c.bf16 %v1829, %v1828
        %v1835 = vpack.c.bf16 %v1831, %v1830
        %v1836 = vpack.c.bf16 %v1833, %v1832
        %v1837 = vld [vmem:[%s803] sm:$0xf]
        %v1838 = vld [vmem:[%s803 + $0x4] sm:$0xf]
        %v1839 = vld [vmem:[%s803 + $0x8] sm:$0xf]
        %v1840 = vld [vmem:[%s803 + $0xc] sm:$0xf]
        %v1841 = vld [vmem:[%s806] sm:$0x1]
        %v1843 = vperm.slane %v1841, 0
        %v1849 = vunpack.c.l.b16 %v1837
        %v1850 = vunpack.c.l.b16 %v1838
        %v1851 = vunpack.c.l.b16 %v1839
        %v1852 = vunpack.c.l.b16 %v1840
        %v1853 = vpack.c.b16 %v1850, %v1849
        %v1854 = vpack.c.b16 %v1852, %v1851
        %v1858 = vsel %vm935, %v1834, 0
        %v1861 = vsel %vm935, %v1835, 0
        %v1864 = vsel %vm935, %v1836, 0
        %1866 = vmatpush.bf16.msra.mxu0 0
        %1867 = vmatpush.bf16.msra.mxu0 0
        %1868 = vmatpush.bf16.msra.mxu0 0
        %1869 = vmatpush.bf16.msra.mxu0 0
        %1870 = vmatpush.bf16.msra.mxu0 0
        %1871 = vmatpush.bf16.msra.mxu0 0
        %1872 = vmatpush.bf16.msra.mxu0 %v1854
        %1873 = vmatpush.bf16.msra.mxu0 %v1853
        %1874 = vmatmul.bf16.gmra.mxu0 %v1858
        %v1875 = vpop.f32.mrf.mxu0
        %v1876 = vadd.f32 %v1843, %v1875
        %v1877 = vpop.f32.mrf.mxu0
        %v1878 = vadd.f32 %v1843, %v1877
        %1879 = vmatmul.bf16.gmra.mxu0 %v1861
        %v1880 = vpop.f32.mrf.mxu0
        %v1881 = vadd.f32 %v1843, %v1880
        %v1882 = vpop.f32.mrf.mxu0
        %v1883 = vadd.f32 %v1843, %v1882
        %1884 = vmatmul.bf16.gmra.mxu0 %v1864
        %v1885 = vpop.f32.mrf.mxu0
        %v1886 = vadd.f32 %v1843, %v1885
        %v1887 = vpop.f32.mrf.mxu0
        %v1888 = vadd.f32 %v1843, %v1887
        %1889 = vdwg.mxu0
        %v1890 = vmul.f32 %v1876, %v1876
        %v1891 = vmul.f32 %v1878, %v1878
        %v1892 = vmul.f32 %v1881, %v1881
        %v1893 = vmul.f32 %v1883, %v1883
        %v1894 = vmul.f32 %v1886, %v1886
        %v1895 = vmul.f32 %v1888, %v1888
        %v1896 = vmul.f32 %v1876, %v1890
        %v1897 = vmul.f32 %v1878, %v1891
        %v1898 = vmul.f32 %v1881, %v1892
        %v1899 = vmul.f32 %v1883, %v1893
        %v1900 = vmul.f32 %v1886, %v1894
        %v1901 = vmul.f32 %v1888, %v1895
        %v1902 = vmul.f32 %v1896, 0.044715
        %v1903 = vmul.f32 %v1897, 0.044715
        %v1904 = vmul.f32 %v1898, 0.044715
        %v1905 = vmul.f32 %v1899, 0.044715
        %v1906 = vmul.f32 %v1900, 0.044715
        %v1907 = vmul.f32 %v1901, 0.044715
        %v1908 = vadd.f32 %v1876, %v1902
        %v1909 = vadd.f32 %v1878, %v1903
        %v1910 = vadd.f32 %v1881, %v1904
        %v1911 = vadd.f32 %v1883, %v1905
        %v1912 = vadd.f32 %v1886, %v1906
        %v1913 = vadd.f32 %v1888, %v1907
        %v1914 = vmul.f32 %v1908, 0.7978846
        %v1915 = vmul.f32 %v1909, 0.7978846
        %v1916 = vmul.f32 %v1910, 0.7978846
        %v1917 = vmul.f32 %v1911, 0.7978846
        %v1918 = vmul.f32 %v1912, 0.7978846
        %v1919 = vmul.f32 %v1913, 0.7978846
        %v1920 = vtanh.pop %v1914
        %v1921 = vtanh.pop %v1915
        %v1922 = vtanh.pop %v1916
        %v1923 = vtanh.pop %v1917
        %v1924 = vtanh.pop %v1918
        %v1925 = vtanh.pop %v1919
        %v1926 = vadd.f32 %v1920, 1.0
        %v1927 = vadd.f32 %v1921, 1.0
        %v1928 = vadd.f32 %v1922, 1.0
        %v1929 = vadd.f32 %v1923, 1.0
        %v1930 = vadd.f32 %v1924, 1.0
        %v1931 = vadd.f32 %v1925, 1.0
        %v1932 = vmul.f32 %v1926, 0.5
        %v1933 = vmul.f32 %v1927, 0.5
        %v1934 = vmul.f32 %v1928, 0.5
        %v1935 = vmul.f32 %v1929, 0.5
        %v1936 = vmul.f32 %v1930, 0.5
        %v1937 = vmul.f32 %v1931, 0.5
        %v1938 = vmul.f32 %v1876, %v1932
        %v1939 = vmul.f32 %v1878, %v1933
        %v1940 = vmul.f32 %v1881, %v1934
        %v1941 = vmul.f32 %v1883, %v1935
        %v1942 = vmul.f32 %v1886, %v1936
        %v1943 = vmul.f32 %v1888, %v1937
        %v1944 = vpack.c.bf16 %v1939, %v1938
        %v1945 = vpack.c.bf16 %v1941, %v1940
        %v1946 = vpack.c.bf16 %v1943, %v1942
        %v1947 = vld [vmem:[%s811] sm:$0xf]
        %v1948 = vld [vmem:[%s811 + $0x4] sm:$0xf]
        %v1949 = vld [vmem:[%s811 + $0x8] sm:$0xf]
        %v1950 = vld [vmem:[%s811 + $0xc] sm:$0xf]
        %v1951 = vld [vmem:[%s811 + $0x10] sm:$0xf]
        %v1952 = vld [vmem:[%s811 + $0x14] sm:$0xf]
        %v1953 = vld [vmem:[%s811 + $0x18] sm:$0xf]
        %v1954 = vld [vmem:[%s811 + $0x1c] sm:$0xf]
        %v1955 = vld [vmem:[%s811 + $0x20] sm:$0xf]
        %v1956 = vld [vmem:[%s811 + $0x24] sm:$0xf]
        %v1957 = vld [vmem:[%s811 + $0x28] sm:$0xf]
        %v1958 = vld [vmem:[%s811 + $0x2c] sm:$0xf]
        %v1959 = vld [vmem:[%s811 + $0x30] sm:$0xf]
        %v1960 = vld [vmem:[%s811 + $0x34] sm:$0xf]
        %v1961 = vld [vmem:[%s811 + $0x38] sm:$0xf]
        %v1962 = vld [vmem:[%s811 + $0x3c] sm:$0xf]
        %v1979 = vunpack.c.l.b16 %v1947
        %v1980 = vunpack.c.l.b16 %v1948
        %v1981 = vunpack.c.l.b16 %v1949
        %v1982 = vunpack.c.l.b16 %v1950
        %v1983 = vunpack.c.l.b16 %v1951
        %v1984 = vunpack.c.l.b16 %v1952
        %v1985 = vunpack.c.l.b16 %v1953
        %v1986 = vunpack.c.l.b16 %v1954
        %v1987 = vunpack.c.l.b16 %v1955
        %v1988 = vunpack.c.l.b16 %v1956
        %v1989 = vunpack.c.l.b16 %v1957
        %v1990 = vunpack.c.l.b16 %v1958
        %v1991 = vunpack.c.l.b16 %v1959
        %v1992 = vunpack.c.l.b16 %v1960
        %v1993 = vunpack.c.l.b16 %v1961
        %v1994 = vunpack.c.l.b16 %v1962
        %v1995 = vpack.c.b16 %v1980, %v1979
        %v1996 = vpack.c.b16 %v1982, %v1981
        %v1997 = vpack.c.b16 %v1984, %v1983
        %v1998 = vpack.c.b16 %v1986, %v1985
        %v1999 = vpack.c.b16 %v1988, %v1987
        %v2000 = vpack.c.b16 %v1990, %v1989
        %v2001 = vpack.c.b16 %v1992, %v1991
        %v2002 = vpack.c.b16 %v1994, %v1993
        %2011 = vmatpush.bf16.msra.mxu0 %v2002
        %2012 = vmatpush.bf16.msra.mxu0 %v2001
        %2013 = vmatpush.bf16.msra.mxu0 %v2000
        %2014 = vmatpush.bf16.msra.mxu0 %v1999
        %2015 = vmatpush.bf16.msra.mxu0 %v1998
        %2016 = vmatpush.bf16.msra.mxu0 %v1997
        %2017 = vmatpush.bf16.msra.mxu0 %v1996
        %2018 = vmatpush.bf16.msra.mxu0 %v1995
        %2019 = vmatmul.bf16.gmra.mxu0 %v1944
        %v2020 = vpop.f32.mrf.mxu0
        %v2021 = vadd.f32 0.0, %v2020
        %v2022 = vpop.f32.mrf.mxu0
        %v2023 = vadd.f32 0.0, %v2022
        %2024 = vmatmul.bf16.gmra.mxu0 %v1945
        %v2025 = vpop.f32.mrf.mxu0
        %v2026 = vadd.f32 0.0, %v2025
        %v2027 = vpop.f32.mrf.mxu0
        %v2028 = vadd.f32 0.0, %v2027
        %2029 = vmatmul.bf16.gmra.mxu0 %v1946
        %v2030 = vpop.f32.mrf.mxu0
        %v2031 = vadd.f32 0.0, %v2030
        %v2032 = vpop.f32.mrf.mxu0
        %v2033 = vadd.f32 0.0, %v2032
        %2034 = vdwg.mxu0
        %v2035 = vadd.f32 %v1676, %v2021
        %v2036 = vadd.f32 %v1677, %v2023
        %v2037 = vadd.f32 %v1678, %v2026
        %v2038 = vadd.f32 %v1679, %v2028
        %v2039 = vadd.f32 %v1680, %v2031
        %v2040 = vadd.f32 %v1681, %v2033
        %v2041 = vld [vmem:[%s814] sm:$0x1]
        %v2043 = vperm.slane %v2041, 0
        %v2045 = vadd.f32 %v2035, %v2043
        %v2046 = vadd.f32 %v2036, %v2043
        %v2047 = vadd.f32 %v2037, %v2043
        %v2048 = vadd.f32 %v2038, %v2043
        %v2049 = vadd.f32 %v2039, %v2043
        %v2050 = vadd.f32 %v2040, %v2043
        %2051 = vst.msk [vmem:[#allocation2] sm:$0xff] %vm935, %v2045
        %2052 = vst.msk [vmem:[#allocation2 + $0x8] sm:$0xff] %vm935, %v2046
        %2053 = vst.msk [vmem:[#allocation2 + $0x10] sm:$0xff] %vm935, %v2047
        %2054 = vst.msk [vmem:[#allocation2 + $0x18] sm:$0xff] %vm935, %v2048
        %2055 = vst.msk [vmem:[#allocation2 + $0x20] sm:$0xff] %vm935, %v2049
        %2056 = vst.msk [vmem:[#allocation2 + $0x28] sm:$0xff] %vm935, %v2050
        %p2057 = scmp.eq.s32.totalorder %s33, 1
        // Predicated region
        $region109: #{tpu_custom_call.1} parent=103 // pred_check
          %p2058 = pneg %p2057
        $region110: #{tpu_custom_call.1} parent=103 // pred_check_branch
          %2060 = sbr.rel (%p2058) target = $region112
        $region111: #{tpu_custom_call.1} parent=103 // pred_region
          %v2062 = vrot.slane %v2048, 7
          %vm2064 = vcmask 1040384
          %v2065 = vsel %vm2064, %v2045, %v2062
          %v2066 = vld [vmem:[%s17] sm:$0x1]
          %v2067 = vld [vmem:[%s18] sm:$0x1]
          %vm2068 = vcmask 254976
          %v2069 = vsel %vm2068, %v2065, 0.0
          %2070 = vadd.xlane.f32.xlu0 %v2069
          %v2071 = vpop.xlane.xlu0 %2070
          %v2072 = vmul.f32 %v2071, %v960
          %v2073 = vsub.f32 %v2065, %v2072
          %v2074 = vmul.f32 %v2073, %v2073
          %v2075 = vsel %vm2068, %v2074, 0.0
          %2076 = vadd.xlane.f32.xlu0 %v2075
          %v2077 = vpop.xlane.xlu0 %2076
          %v2078 = vmul.f32 %v2077, %v960
          %v2079 = vadd.f32 %v2078, 1e-06
          %v2080 = vrsqrt.pop %v2079
          %v2081 = vmul.f32 %v2080, %v2079
          %v2082 = vmul.f32 %v2081, %v2080
          %v2083 = vmul.f32 0.5, %v2082
          %v2084 = vsub.f32 1.5, %v2083
          %v2085 = vmul.f32 %v2080, %v2084
          %vm2086 = vweird.f32 %v2079
          %vm2087 = vweird.f32 %v2080
          %vm2088 = vmor %vm2086, %vm2087
          %v2089 = vsel %vm2088, %v2080, %v2085
          %v2090 = vmul.f32 %v2073, %v2089
          %v2092 = vperm.slane %v2066, 0
          %v2094 = vmul.f32 %v2090, %v2092
          %v2096 = vperm.slane %v2067, 0
          %v2098 = vadd.f32 %v2094, %v2096
          %v2099 = vpack.c.bf16 %v2098, %v2098
          %v2100 = vld [vmem:[%s19] sm:$0xf]
          %v2101 = vld [vmem:[%s19 + $0x4] sm:$0xf]
          %v2102 = vld [vmem:[%s19 + $0x8] sm:$0xf]
          %v2103 = vld [vmem:[%s19 + $0xc] sm:$0xf]
          %v2104 = vld [vmem:[%s20] sm:$0x1]
          %v2106 = vperm.slane %v2104, 0
          %v2112 = vunpack.c.l.b16 %v2100
          %v2113 = vunpack.c.l.b16 %v2101
          %v2114 = vunpack.c.l.b16 %v2102
          %v2115 = vunpack.c.l.b16 %v2103
          %v2116 = vpack.c.b16 %v2113, %v2112
          %v2117 = vpack.c.b16 %v2115, %v2114
          %v2121 = vsel %vm935, %v2099, 0
          %2123 = vmatpush.bf16.msra.mxu0 0
          %2124 = vmatpush.bf16.msra.mxu0 0
          %2125 = vmatpush.bf16.msra.mxu0 0
          %2126 = vmatpush.bf16.msra.mxu0 0
          %2127 = vmatpush.bf16.msra.mxu0 0
          %2128 = vmatpush.bf16.msra.mxu0 0
          %2129 = vmatpush.bf16.msra.mxu0 %v2117
          %2130 = vmatpush.bf16.msra.mxu0 %v2116
          %2131 = vmatmul.bf16.gmra.mxu0 %v2121
          %v2132 = vpop.f32.mrf.mxu0
          %v2133 = vadd.f32 %v2106, %v2132
          %v2134 = vpop.f32.mrf.mxu0
          %2135 = vdwg.mxu0
          %2136 = vst [vmem:[#allocation4] sm:$0x3] %v2133
        $region112: #{tpu_custom_call.1} parent=103 // pred_fallthru
          _
        // Predicated region
        $region113: #{tpu_custom_call.1} parent=103 // pred_check
          %p2137 = pneg %p547
        $region114: #{tpu_custom_call.1} parent=103 // pred_check_branch
          %2139 = sbr.rel (%p2137) target = $region116
        $region115: #{tpu_custom_call.1} parent=103 // pred_region
          %2141 = vsyncadd [#allocation5], 0
          %s2143 = sshll.u32 [#allocation4], 4
          %s2144 = int_to_ptr.vmem [resolvable:$true] %s2143
          %s2145 = sshll.u32 %s21, 4
          %s2146 = int_to_ptr.hbm [resolvable:$true] %s2145
          %2148 = dma.vmem_to_hbm [thread:$0]  %s2144, 32, %s2146, [#allocation5]
        $region116: #{tpu_custom_call.1} parent=103 // pred_fallthru
          _
        // Predicated region
        $region117: #{tpu_custom_call.1} parent=103 // pred_check
          %p2149 = pneg %p547
        $region118: #{tpu_custom_call.1} parent=103 // pred_check_branch
          %2151 = sbr.rel (%p2149) target = $region120
        $region119: #{tpu_custom_call.1} parent=103 // pred_region
          %2153 = dma.done [#allocation5], 32
        $region120: #{tpu_custom_call.1} parent=103 // pred_fallthru
          _
      $region104: #{tpu_custom_call.1} parent=5 // pred_fallthru
        _
      %p2154 = scmp.le.s32.totalorder 2, %s28
      // Predicated region
      $region121: #{tpu_custom_call.1} parent=5 // pred_check
        %p2155 = pneg %p2154
      $region122: #{tpu_custom_call.1} parent=5 // pred_check_branch
        %2157 = sbr.rel (%p2155) target = $region124
      $region123: #{tpu_custom_call.1} parent=5 // pred_region
        %s2158 = ssub.s32 %s28, 2
      $region124: #{tpu_custom_call.1} parent=5 // pred_fallthru
        _
    $region6: #{tpu_custom_call.1} parent=1 // loop_footer
      %s32 = sadd.s32 1, %s28
    $region7: #{tpu_custom_call.1} parent=1 // loop_footer_branch
      %27 = sbr.rel target = $region3
    $region8: #{tpu_custom_call.1} parent=1 // loop_exit
      _
    %2159 = vsyncpa [#allocation5], 1
    %s2160 = scalar_lea.sflag [#allocation5], 1
    %2161 = vsyncpa %s2160, 1

</llo_original>
